<compile_context>
chip_gen: v6e
topology: v6e:2x2x1
jax: 0.10.0
libtpu: 0.0.40
codegen_flags: <defaults>
</compile_context>

<pallas_src>
import jax
import jax.numpy as jnp
from jax.experimental import pallas as pl
from jax.experimental.pallas import tpu as pltpu


def mlp_kernel(x_ref, w1_ref, b1_ref, w2_ref, b2_ref, w3_ref, b3_ref, o_ref):
    # Layer 1: Linear (bf16 MXU, f32 accumulate) + bias + ReLU.
    h1 = jnp.dot(x_ref[...], w1_ref[...], preferred_element_type=jnp.float32)
    h1 = jnp.maximum(h1 + b1_ref[...], 0.0)
    # Dropout(0.2) == identity at inference.

    # Layer 2: Linear + bias + ReLU.
    h2 = jnp.dot(h1.astype(w2_ref.dtype), w2_ref[...],
                 preferred_element_type=jnp.float32)
    h2 = jnp.maximum(h2 + b2_ref[...], 0.0)
    # Dropout(0.2) == identity at inference.

    # Layer 3: Linear (logits), written to a lane-dense (tb, 128) slab.
    o = jnp.dot(h2.astype(w3_ref.dtype), w3_ref[...],
                preferred_element_type=jnp.float32)
    o_ref[...] = (o + b3_ref[...]).astype(o_ref.dtype)


def _round_up(n, m):
    return ((n + m - 1) // m) * m


def mlp_forward(x, w1, b1, w2, b2, w3, b3, *, tb=128):
    """x: (B, D_in) f32; w*: (in, out) f32; b*: (1, out) f32. Returns (B, C) f32."""
    B, D_in = x.shape
    H = w1.shape[1]
    C = w3.shape[1]

    # --- adaptive batch tile: don't pad tiny batches all the way to 128. ---
    tb = min(tb, _round_up(B, 16))

    # --- bf16 compute path (f32 accumulation happens inside the kernel). ---
    xb = x.astype(jnp.bfloat16)
    w1b = w1.astype(jnp.bfloat16)
    w2b = w2.astype(jnp.bfloat16)

    # --- lane-dense output: pad the class dim up to 128. ---
    Cp = max(128, _round_up(C, 128))
    w3p = jnp.zeros((H, Cp), jnp.bfloat16).at[:, :C].set(w3.astype(jnp.bfloat16))
    b3p = jnp.zeros((1, Cp), jnp.float32).at[:, :C].set(b3)

    # --- pad batch to a multiple of the tile (ragged batches allowed). ---
    Bp = _round_up(B, tb)
    if Bp != B:
        xb = jnp.pad(xb, ((0, Bp - B), (0, 0)))
    grid = (Bp // tb,)

    # Weights / biases are small -> each kept as a single full-array block,
    # resident in VMEM across all batch tiles (constant index_map => no re-DMA).
    full = lambda shape: pl.BlockSpec(shape, lambda i: (0, 0))

    out = pl.pallas_call(
        mlp_kernel,
        out_shape=jax.ShapeDtypeStruct((Bp, Cp), jnp.float32),
        grid_spec=pltpu.PrefetchScalarGridSpec(
            num_scalar_prefetch=0,
            grid=grid,
            in_specs=[
                pl.BlockSpec((tb, D_in), lambda i: (i, 0)),   # x tile (bf16)
                full((D_in, H)),                              # W1 (bf16)
                full((1, H)),                                 # b1 (f32)
                full((H, H)),                                 # W2 (bf16)
                full((1, H)),                                 # b2 (f32)
                full((H, Cp)),                                # W3 padded (bf16)
                full((1, Cp)),                                # b3 padded (f32)
            ],
            out_specs=pl.BlockSpec((tb, Cp), lambda i: (i, 0)),
        ),
        compiler_params=pltpu.CompilerParams(
            dimension_semantics=("parallel",),
            # Double-buffered x (tb,D_in) bf16 + out (tb,Cp) f32 plus resident
            # bf16 weights is ~2 MiB at these sizes; 32 MiB leaves ample
            # headroom and stays within v7x's 64 MiB physical VMEM.
            vmem_limit_bytes=32 * 1024 * 1024,
        ),
    )(xb, w1b, b1, w2b, b2, w3p, b3p)

    return out[:B, :C]


def init_linear(key, fan_in, fan_out):
    # Deterministic init mimicking PyTorch nn.Linear: U(-1/sqrt(fan_in), +1/sqrt(fan_in)).
    kw, kb = jax.random.split(key)
    bound = 1.0 / jnp.sqrt(fan_in)
    # stored as (in_features, out_features), i.e. transposed vs. torch weight
    w = jax.random.uniform(kw, (fan_in, fan_out), jnp.float32, -bound, bound)
    b = jax.random.uniform(kb, (1, fan_out), jnp.float32, -bound, bound)
    return w, b


if __name__ == "__main__":
    # Module-default feature sizes (input_dim=768, hidden_dim=512, num_classes=2)
    # with a small deterministic batch.
    batch, input_dim, hidden_dim, num_classes = 16, 768, 512, 2

    key = jax.random.PRNGKey(0)
    kx, k1, k2, k3 = jax.random.split(key, 4)

    x = jax.random.normal(kx, (batch, input_dim), jnp.float32)
    w1, b1 = init_linear(k1, input_dim, hidden_dim)
    w2, b2 = init_linear(k2, hidden_dim, hidden_dim)
    w3, b3 = init_linear(k3, hidden_dim, num_classes)

    out = mlp_forward(x, w1, b1, w2, b2, w3, b3)
    out = jax.block_until_ready(out)

    # Pure-JAX reference in the same bf16-matmul / f32-accumulate precision
    # (eval-mode dropout == identity).
    bf = jnp.bfloat16
    ref = jnp.maximum(
        jnp.dot(x.astype(bf), w1.astype(bf), preferred_element_type=jnp.float32) + b1, 0.0)
    ref = jnp.maximum(
        jnp.dot(ref.astype(bf), w2.astype(bf), preferred_element_type=jnp.float32) + b2, 0.0)
    ref = jnp.dot(ref.astype(bf), w3.astype(bf), preferred_element_type=jnp.float32) + b3

    assert out.shape == (batch, num_classes)
    assert jnp.allclose(out, ref, atol=2e-2, rtol=2e-2), float(jnp.max(jnp.abs(out - ref)))

    print("KERNEL_OK")
</pallas_src>

<mosaic_0001>
module attributes {stable_mosaic.version = 11 : i64} {
  func.func @mlp_kernel(%arg0: i32, %arg1: memref<16x768xbf16, #tpu.memory_space<vmem>>, %arg2: memref<768x512xbf16, #tpu.memory_space<vmem>>, %arg3: memref<1x512xf32, #tpu.memory_space<vmem>>, %arg4: memref<512x512xbf16, #tpu.memory_space<vmem>>, %arg5: memref<1x512xf32, #tpu.memory_space<vmem>>, %arg6: memref<512x128xbf16, #tpu.memory_space<vmem>>, %arg7: memref<1x128xf32, #tpu.memory_space<vmem>>, %arg8: memref<16x128xf32, #tpu.memory_space<vmem>>) attributes {dimension_semantics = [#tpu.dimension_semantics<parallel>], iteration_bounds = array<i64: 1>, scalar_prefetch = 0 : i64, scratch_operands = 0 : i64, tpu.core_type = #tpu.core_type<tc>, window_params = [{transform_indices = @transform_0, window_bounds = array<i64: 16, 768>}, {pipeline_mode = #tpu.pipeline_mode<synchronous>, transform_indices = @transform_1, window_bounds = array<i64: 768, 512>}, {pipeline_mode = #tpu.pipeline_mode<synchronous>, transform_indices = @transform_2, window_bounds = array<i64: 1, 512>}, {pipeline_mode = #tpu.pipeline_mode<synchronous>, transform_indices = @transform_3, window_bounds = array<i64: 512, 512>}, {pipeline_mode = #tpu.pipeline_mode<synchronous>, transform_indices = @transform_4, window_bounds = array<i64: 1, 512>}, {pipeline_mode = #tpu.pipeline_mode<synchronous>, transform_indices = @transform_5, window_bounds = array<i64: 512, 128>}, {pipeline_mode = #tpu.pipeline_mode<synchronous>, transform_indices = @transform_6, window_bounds = array<i64: 1, 128>}, {transform_indices = @transform_7, window_bounds = array<i64: 16, 128>}]} {
    %c0 = arith.constant 0 : index
    %c0_0 = arith.constant 0 : index
    %0 = vector.load %arg1[%c0, %c0_0] : memref<16x768xbf16, #tpu.memory_space<vmem>>, vector<16x768xbf16>
    %c0_1 = arith.constant 0 : index
    %c0_2 = arith.constant 0 : index
    %1 = vector.load %arg2[%c0_1, %c0_2] : memref<768x512xbf16, #tpu.memory_space<vmem>>, vector<768x512xbf16>
    %cst = arith.constant dense<0.000000e+00> : vector<16x512xf32>
    %2 = tpu.matmul %0, %1, %cst {dimension_numbers = #tpu.dot_dimension_numbers<[1], [0], [0], [1], [0, 0, 1, 1], [], []>} : vector<16x768xbf16>, vector<768x512xbf16>, vector<16x512xf32> -> vector<16x512xf32>
    %c0_3 = arith.constant 0 : index
    %c0_4 = arith.constant 0 : index
    %3 = vector.load %arg3[%c0_3, %c0_4] : memref<1x512xf32, #tpu.memory_space<vmem>>, vector<1x512xf32>
    %4 = vector.broadcast %3 : vector<1x512xf32> to vector<16x512xf32>
    %5 = arith.addf %2, %4 : vector<16x512xf32>
    %cst_5 = arith.constant 0.000000e+00 : f32
    %6 = vector.broadcast %cst_5 : f32 to vector<16x512xf32>
    %7 = arith.maximumf %5, %6 : vector<16x512xf32>
    %8 = arith.truncf %7 : vector<16x512xf32> to vector<16x512xbf16>
    %c0_6 = arith.constant 0 : index
    %c0_7 = arith.constant 0 : index
    %9 = vector.load %arg4[%c0_6, %c0_7] : memref<512x512xbf16, #tpu.memory_space<vmem>>, vector<512x512xbf16>
    %cst_8 = arith.constant dense<0.000000e+00> : vector<16x512xf32>
    %10 = tpu.matmul %8, %9, %cst_8 {dimension_numbers = #tpu.dot_dimension_numbers<[1], [0], [0], [1], [0, 0, 1, 1], [], []>} : vector<16x512xbf16>, vector<512x512xbf16>, vector<16x512xf32> -> vector<16x512xf32>
    %c0_9 = arith.constant 0 : index
    %c0_10 = arith.constant 0 : index
    %11 = vector.load %arg5[%c0_9, %c0_10] : memref<1x512xf32, #tpu.memory_space<vmem>>, vector<1x512xf32>
    %12 = vector.broadcast %11 : vector<1x512xf32> to vector<16x512xf32>
    %13 = arith.addf %10, %12 : vector<16x512xf32>
    %cst_11 = arith.constant 0.000000e+00 : f32
    %14 = vector.broadcast %cst_11 : f32 to vector<16x512xf32>
    %15 = arith.maximumf %13, %14 : vector<16x512xf32>
    %16 = arith.truncf %15 : vector<16x512xf32> to vector<16x512xbf16>
    %c0_12 = arith.constant 0 : index
    %c0_13 = arith.constant 0 : index
    %17 = vector.load %arg6[%c0_12, %c0_13] : memref<512x128xbf16, #tpu.memory_space<vmem>>, vector<512x128xbf16>
    %cst_14 = arith.constant dense<0.000000e+00> : vector<16x128xf32>
    %18 = tpu.matmul %16, %17, %cst_14 {dimension_numbers = #tpu.dot_dimension_numbers<[1], [0], [0], [1], [0, 0, 1, 1], [], []>} : vector<16x512xbf16>, vector<512x128xbf16>, vector<16x128xf32> -> vector<16x128xf32>
    %c0_15 = arith.constant 0 : index
    %c0_16 = arith.constant 0 : index
    %19 = vector.load %arg7[%c0_15, %c0_16] : memref<1x128xf32, #tpu.memory_space<vmem>>, vector<1x128xf32>
    %20 = vector.broadcast %19 : vector<1x128xf32> to vector<16x128xf32>
    %21 = arith.addf %18, %20 : vector<16x128xf32>
    %c0_17 = arith.constant 0 : index
    %c0_18 = arith.constant 0 : index
    %22 = vector.load %arg8[%c0_17, %c0_18] : memref<16x128xf32, #tpu.memory_space<vmem>>, vector<16x128xf32>
    tpu.vector_store %arg8[%c0_17, %c0_18], %21 {strides = array<i32>} : memref<16x128xf32, #tpu.memory_space<vmem>>, vector<16x128xf32>,
    return
  }
  func.func @transform_0(%arg0: i32) -> (i32, i32) {
    %c0_i32 = arith.constant 0 : i32
    %c0_i32_0 = arith.constant 0 : i32
    return %arg0, %c0_i32 : i32, i32
  }
  func.func @transform_1(%arg0: i32) -> (i32, i32) {
    %c0_i32 = arith.constant 0 : i32
    %c0_i32_0 = arith.constant 0 : i32
    %c0_i32_1 = arith.constant 0 : i32
    return %c0_i32, %c0_i32_0 : i32, i32
  }
  func.func @transform_2(%arg0: i32) -> (i32, i32) {
    %c0_i32 = arith.constant 0 : i32
    %c0_i32_0 = arith.constant 0 : i32
    %c0_i32_1 = arith.constant 0 : i32
    return %c0_i32, %c0_i32_0 : i32, i32
  }
  func.func @transform_3(%arg0: i32) -> (i32, i32) {
    %c0_i32 = arith.constant 0 : i32
    %c0_i32_0 = arith.constant 0 : i32
    %c0_i32_1 = arith.constant 0 : i32
    return %c0_i32, %c0_i32_0 : i32, i32
  }
  func.func @transform_4(%arg0: i32) -> (i32, i32) {
    %c0_i32 = arith.constant 0 : i32
    %c0_i32_0 = arith.constant 0 : i32
    %c0_i32_1 = arith.constant 0 : i32
    return %c0_i32, %c0_i32_0 : i32, i32
  }
  func.func @transform_5(%arg0: i32) -> (i32, i32) {
    %c0_i32 = arith.constant 0 : i32
    %c0_i32_0 = arith.constant 0 : i32
    %c0_i32_1 = arith.constant 0 : i32
    return %c0_i32, %c0_i32_0 : i32, i32
  }
  func.func @transform_6(%arg0: i32) -> (i32, i32) {
    %c0_i32 = arith.constant 0 : i32
    %c0_i32_0 = arith.constant 0 : i32
    %c0_i32_1 = arith.constant 0 : i32
    return %c0_i32, %c0_i32_0 : i32, i32
  }
  func.func @transform_7(%arg0: i32) -> (i32, i32) {
    %c0_i32 = arith.constant 0 : i32
    %c0_i32_0 = arith.constant 0 : i32
    return %arg0, %c0_i32 : i32, i32
  }
}

</mosaic_0001>

<llo_original>
// kernel: tpu_custom_call.1
$region0: #{tpu_custom_call.1}
  #allocation0 [shape = 'u32[]', space=smem, size = 0x4, offset = 0x4, fixed_abs, tag = 'smem constant byte address 0x4 - core index']
  #allocation1 [shape = 'u32[144,128]{1,0:T(1,128)}', space=vmem, size = 0x12000, scoped, tag = 'internal scratch']
  %s0 = inlined_call_operand.hbm [shape: bf16[16,768], index: 0, kind: input, shape index: {}]
  %s1 = inlined_call_operand.hbm [shape: bf16[768,512], index: 1, kind: input, shape index: {}]
  %s2 = inlined_call_operand.hbm [shape: f32[1,512], index: 2, kind: input, shape index: {}]
  %s3 = inlined_call_operand.hbm [shape: bf16[512,512], index: 3, kind: input, shape index: {}]
  %s4 = inlined_call_operand.vmem [shape: f32[1,512], index: 4, kind: input, shape index: {}]
  %s5 = inlined_call_operand.hbm [shape: bf16[512,128], index: 5, kind: input, shape index: {}]
  %s6 = inlined_call_operand.vmem [shape: f32[1,128], index: 6, kind: input, shape index: {}]
  %s7 = inlined_call_operand.hbm [shape: f32[16,128], index: 7, kind: output, shape index: {}]
  %s8 = sld [smem:[#allocation0]]
  $region58: #{tpu_custom_call.1} parent=0
    _
  %s10 = ssub.s32 1, %s8
  %s11 = scalar_select 0, %s10, %s8
  $region1: #{tpu_custom_call.1} parent=0
    #allocation2 [shape = 'u8[24576]{0}', space=vmem, size = 0x6000, scoped, tag = 'input window, operand 0, single buffered']
    #allocation3 [shape = 's32[1]{0}', space=sflag, size = 0x4, scoped, tag = 'scoped memory for tpu_custom_call.1']
    #allocation4 [shape = 's32[1]{0}', space=sflag, size = 0x4, scoped, tag = 'scoped memory for tpu_custom_call.1']
    #allocation5 [shape = 'u8[786432]{0}', space=vmem, size = 0xc0000, scoped, tag = 'input window, operand 1, single buffered']
    #allocation6 [shape = 's32[1]{0}', space=sflag, size = 0x4, scoped, tag = 'scoped memory for tpu_custom_call.1']
    #allocation7 [shape = 'u8[2048]{0}', space=vmem, size = 0x800, scoped, tag = 'input window, operand 2, single buffered']
    #allocation8 [shape = 'u8[524288]{0}', space=vmem, size = 0x80000, scoped, tag = 'input window, operand 3, single buffered']
    #allocation9 [shape = 's32[1]{0}', space=sflag, size = 0x4, scoped, tag = 'scoped memory for tpu_custom_call.1']
    #allocation10 [shape = 'u8[131072]{0}', space=vmem, size = 0x20000, scoped, tag = 'input window, operand 5, single buffered']
    #allocation11 [shape = 'u8[8192]{0}', space=vmem, size = 0x2000, scoped, tag = 'output window, operand 0, single buffered']
    %12 = vsyncpa [#allocation3], 0
    %13 = vsyncpa [#allocation6], 0
    %14 = vsyncpa [#allocation9], 0
    %15 = vsyncpa [#allocation4], 0
    // Predicated region
    $region2: #{tpu_custom_call.1} parent=1 // pred_check
      _
    $region3: #{tpu_custom_call.1} parent=1 // pred_check_branch
      %17 = sbr.rel (0) target = $region5
    $region4: #{tpu_custom_call.1} parent=1 // pred_region
      %s19 = ssub.s32 768, 768
      %20 = vsyncadd [#allocation3], %s19
      %s21 = sshll.u32 [#allocation2], 4
      %s22 = int_to_ptr.vmem [resolvable:$true] %s21
      %27 = dma.hbm_to_vmem [thread:$0]  %s0, 768, %s22, [#allocation3], 384, 384, 24
    $region5: #{tpu_custom_call.1} parent=1 // pred_fallthru
      _
    // Predicated region
    $region6: #{tpu_custom_call.1} parent=1 // pred_check
      _
    $region7: #{tpu_custom_call.1} parent=1 // pred_check_branch
      %29 = sbr.rel (0) target = $region9
    $region8: #{tpu_custom_call.1} parent=1 // pred_region
      %s31 = ssub.s32 24576, 24576
      %32 = vsyncadd [#allocation6], %s31
      %s33 = sshll.u32 [#allocation5], 4
      %s34 = int_to_ptr.vmem [resolvable:$true] %s33
      %39 = dma.hbm_to_vmem [thread:$0]  %s1, 24576, %s34, [#allocation6], 256, 256, 16
    $region9: #{tpu_custom_call.1} parent=1 // pred_fallthru
      _
    // Predicated region
    $region10: #{tpu_custom_call.1} parent=1 // pred_check
      _
    $region11: #{tpu_custom_call.1} parent=1 // pred_check_branch
      %41 = sbr.rel (0) target = $region13
    $region12: #{tpu_custom_call.1} parent=1 // pred_region
      %s43 = ssub.s32 64, 64
      %44 = vsyncadd [#allocation6], %s43
      %s46 = sshll.u32 [#allocation7], 4
      %s47 = int_to_ptr.vmem [resolvable:$true] %s46
      %49 = dma.hbm_to_vmem [thread:$0]  %s2, 64, %s47, [#allocation6]
    $region13: #{tpu_custom_call.1} parent=1 // pred_fallthru
      _
    // Predicated region
    $region14: #{tpu_custom_call.1} parent=1 // pred_check
      _
    $region15: #{tpu_custom_call.1} parent=1 // pred_check_branch
      %51 = sbr.rel (0) target = $region17
    $region16: #{tpu_custom_call.1} parent=1 // pred_region
      %s53 = ssub.s32 16384, 16384
      %54 = vsyncadd [#allocation9], %s53
      %s55 = sshll.u32 [#allocation8], 4
      %s56 = int_to_ptr.vmem [resolvable:$true] %s55
      %61 = dma.hbm_to_vmem [thread:$0]  %s3, 16384, %s56, [#allocation9], 256, 256, 16
    $region17: #{tpu_custom_call.1} parent=1 // pred_fallthru
      _
    // Predicated region
    $region18: #{tpu_custom_call.1} parent=1 // pred_check
      _
    $region19: #{tpu_custom_call.1} parent=1 // pred_check_branch
      %63 = sbr.rel (0) target = $region21
    $region20: #{tpu_custom_call.1} parent=1 // pred_region
      _
    $region21: #{tpu_custom_call.1} parent=1 // pred_fallthru
      _
    // Predicated region
    $region22: #{tpu_custom_call.1} parent=1 // pred_check
      _
    $region23: #{tpu_custom_call.1} parent=1 // pred_check_branch
      %65 = sbr.rel (0) target = $region25
    $region24: #{tpu_custom_call.1} parent=1 // pred_region
      %s67 = ssub.s32 4096, 4096
      %68 = vsyncadd [#allocation9], %s67
      %s69 = sshll.u32 [#allocation10], 4
      %s70 = int_to_ptr.vmem [resolvable:$true] %s69
      %75 = dma.hbm_to_vmem [thread:$0]  %s5, 4096, %s70, [#allocation9], 64, 64, 4
    $region25: #{tpu_custom_call.1} parent=1 // pred_fallthru
      _
    // Predicated region
    $region26: #{tpu_custom_call.1} parent=1 // pred_check
      _
    $region27: #{tpu_custom_call.1} parent=1 // pred_check_branch
      %77 = sbr.rel (0) target = $region29
    $region28: #{tpu_custom_call.1} parent=1 // pred_region
      _
    $region29: #{tpu_custom_call.1} parent=1 // pred_fallthru
      _
    // Predicated region
    $region30: #{tpu_custom_call.1} parent=1 // pred_check
      _
    $region31: #{tpu_custom_call.1} parent=1 // pred_check_branch
      %79 = sbr.rel (0) target = $region33
    $region32: #{tpu_custom_call.1} parent=1 // pred_region
      %80 = dma.done [#allocation3], 768
    $region33: #{tpu_custom_call.1} parent=1 // pred_fallthru
      _
    // Predicated region
    $region34: #{tpu_custom_call.1} parent=1 // pred_check
      _
    $region35: #{tpu_custom_call.1} parent=1 // pred_check_branch
      %82 = sbr.rel (0) target = $region37
    $region36: #{tpu_custom_call.1} parent=1 // pred_region
      %83 = dma.done [#allocation6], 24576
    $region37: #{tpu_custom_call.1} parent=1 // pred_fallthru
      _
    // Predicated region
    $region38: #{tpu_custom_call.1} parent=1 // pred_check
      _
    $region39: #{tpu_custom_call.1} parent=1 // pred_check_branch
      %85 = sbr.rel (0) target = $region41
    $region40: #{tpu_custom_call.1} parent=1 // pred_region
      %86 = dma.done [#allocation6], 64
    $region41: #{tpu_custom_call.1} parent=1 // pred_fallthru
      _
    // Predicated region
    $region42: #{tpu_custom_call.1} parent=1 // pred_check
      _
    $region43: #{tpu_custom_call.1} parent=1 // pred_check_branch
      %88 = sbr.rel (0) target = $region45
    $region44: #{tpu_custom_call.1} parent=1 // pred_region
      %89 = dma.done [#allocation9], 16384
    $region45: #{tpu_custom_call.1} parent=1 // pred_fallthru
      _
    // Predicated region
    $region46: #{tpu_custom_call.1} parent=1 // pred_check
      _
    $region47: #{tpu_custom_call.1} parent=1 // pred_check_branch
      %91 = sbr.rel (0) target = $region49
    $region48: #{tpu_custom_call.1} parent=1 // pred_region
      %92 = dma.done [#allocation9], 4096
    $region49: #{tpu_custom_call.1} parent=1 // pred_fallthru
      _
    %v94 = vld [vmem:[#allocation2] sm:$0xff]
    %v95 = vld [vmem:[#allocation2 + $0x8] sm:$0xff]
    %v96 = vld [vmem:[#allocation2 + $0x10] sm:$0xff]
    %v97 = vld [vmem:[#allocation2 + $0x18] sm:$0xff]
    %v98 = vld [vmem:[#allocation2 + $0x20] sm:$0xff]
    %v99 = vld [vmem:[#allocation2 + $0x28] sm:$0xff]
    %v100 = vld [vmem:[#allocation5] sm:$0xff]
    %v101 = vld [vmem:[#allocation5 + $0x8] sm:$0xff]
    %v102 = vld [vmem:[#allocation5 + $0x10] sm:$0xff]
    %v103 = vld [vmem:[#allocation5 + $0x18] sm:$0xff]
    %v104 = vld [vmem:[#allocation5 + $0x20] sm:$0xff]
    %v105 = vld [vmem:[#allocation5 + $0x28] sm:$0xff]
    %v106 = vld [vmem:[#allocation5 + $0x30] sm:$0xff]
    %v107 = vld [vmem:[#allocation5 + $0x38] sm:$0xff]
    %v108 = vld [vmem:[#allocation5 + $0x40] sm:$0xff]
    %v109 = vld [vmem:[#allocation5 + $0x48] sm:$0xff]
    %v110 = vld [vmem:[#allocation5 + $0x50] sm:$0xff]
    %v111 = vld [vmem:[#allocation5 + $0x58] sm:$0xff]
    %v112 = vld [vmem:[#allocation5 + $0x60] sm:$0xff]
    %v113 = vld [vmem:[#allocation5 + $0x68] sm:$0xff]
    %v114 = vld [vmem:[#allocation5 + $0x70] sm:$0xff]
    %v115 = vld [vmem:[#allocation5 + $0x78] sm:$0xff]
    %v116 = vld [vmem:[#allocation5 + $0x80] sm:$0xff]
    %v117 = vld [vmem:[#allocation5 + $0x88] sm:$0xff]
    %v118 = vld [vmem:[#allocation5 + $0x90] sm:$0xff]
    %v119 = vld [vmem:[#allocation5 + $0x98] sm:$0xff]
    %v120 = vld [vmem:[#allocation5 + $0xa0] sm:$0xff]
    %v121 = vld [vmem:[#allocation5 + $0xa8] sm:$0xff]
    %v122 = vld [vmem:[#allocation5 + $0xb0] sm:$0xff]
    %v123 = vld [vmem:[#allocation5 + $0xb8] sm:$0xff]
    %v124 = vld [vmem:[#allocation5 + $0xc0] sm:$0xff]
    %v125 = vld [vmem:[#allocation5 + $0xc8] sm:$0xff]
    %v126 = vld [vmem:[#allocation5 + $0xd0] sm:$0xff]
    %v127 = vld [vmem:[#allocation5 + $0xd8] sm:$0xff]
    %v128 = vld [vmem:[#allocation5 + $0xe0] sm:$0xff]
    %v129 = vld [vmem:[#allocation5 + $0xe8] sm:$0xff]
    %v130 = vld [vmem:[#allocation5 + $0xf0] sm:$0xff]
    %v131 = vld [vmem:[#allocation5 + $0xf8] sm:$0xff]
    %v132 = vld [vmem:[#allocation5 + $0x100] sm:$0xff]
    %v133 = vld [vmem:[#allocation5 + $0x108] sm:$0xff]
    %v134 = vld [vmem:[#allocation5 + $0x110] sm:$0xff]
    %v135 = vld [vmem:[#allocation5 + $0x118] sm:$0xff]
    %v136 = vld [vmem:[#allocation5 + $0x120] sm:$0xff]
    %v137 = vld [vmem:[#allocation5 + $0x128] sm:$0xff]
    %v138 = vld [vmem:[#allocation5 + $0x130] sm:$0xff]
    %v139 = vld [vmem:[#allocation5 + $0x138] sm:$0xff]
    %v140 = vld [vmem:[#allocation5 + $0x140] sm:$0xff]
    %v141 = vld [vmem:[#allocation5 + $0x148] sm:$0xff]
    %v142 = vld [vmem:[#allocation5 + $0x150] sm:$0xff]
    %v143 = vld [vmem:[#allocation5 + $0x158] sm:$0xff]
    %v144 = vld [vmem:[#allocation5 + $0x160] sm:$0xff]
    %v145 = vld [vmem:[#allocation5 + $0x168] sm:$0xff]
    %v146 = vld [vmem:[#allocation5 + $0x170] sm:$0xff]
    %v147 = vld [vmem:[#allocation5 + $0x178] sm:$0xff]
    %v148 = vld [vmem:[#allocation5 + $0x180] sm:$0xff]
    %v149 = vld [vmem:[#allocation5 + $0x188] sm:$0xff]
    %v150 = vld [vmem:[#allocation5 + $0x190] sm:$0xff]
    %v151 = vld [vmem:[#allocation5 + $0x198] sm:$0xff]
    %v152 = vld [vmem:[#allocation5 + $0x1a0] sm:$0xff]
    %v153 = vld [vmem:[#allocation5 + $0x1a8] sm:$0xff]
    %v154 = vld [vmem:[#allocation5 + $0x1b0] sm:$0xff]
    %v155 = vld [vmem:[#allocation5 + $0x1b8] sm:$0xff]
    %v156 = vld [vmem:[#allocation5 + $0x1c0] sm:$0xff]
    %v157 = vld [vmem:[#allocation5 + $0x1c8] sm:$0xff]
    %v158 = vld [vmem:[#allocation5 + $0x1d0] sm:$0xff]
    %v159 = vld [vmem:[#allocation5 + $0x1d8] sm:$0xff]
    %v160 = vld [vmem:[#allocation5 + $0x1e0] sm:$0xff]
    %v161 = vld [vmem:[#allocation5 + $0x1e8] sm:$0xff]
    %v162 = vld [vmem:[#allocation5 + $0x1f0] sm:$0xff]
    %v163 = vld [vmem:[#allocation5 + $0x1f8] sm:$0xff]
    %v164 = vld [vmem:[#allocation5 + $0x200] sm:$0xff]
    %v165 = vld [vmem:[#allocation5 + $0x208] sm:$0xff]
    %v166 = vld [vmem:[#allocation5 + $0x210] sm:$0xff]
    %v167 = vld [vmem:[#allocation5 + $0x218] sm:$0xff]
    %v168 = vld [vmem:[#allocation5 + $0x220] sm:$0xff]
    %v169 = vld [vmem:[#allocation5 + $0x228] sm:$0xff]
    %v170 = vld [vmem:[#allocation5 + $0x230] sm:$0xff]
    %v171 = vld [vmem:[#allocation5 + $0x238] sm:$0xff]
    %v172 = vld [vmem:[#allocation5 + $0x240] sm:$0xff]
    %v173 = vld [vmem:[#allocation5 + $0x248] sm:$0xff]
    %v174 = vld [vmem:[#allocation5 + $0x250] sm:$0xff]
    %v175 = vld [vmem:[#allocation5 + $0x258] sm:$0xff]
    %v176 = vld [vmem:[#allocation5 + $0x260] sm:$0xff]
    %v177 = vld [vmem:[#allocation5 + $0x268] sm:$0xff]
    %v178 = vld [vmem:[#allocation5 + $0x270] sm:$0xff]
    %v179 = vld [vmem:[#allocation5 + $0x278] sm:$0xff]
    %v180 = vld [vmem:[#allocation5 + $0x280] sm:$0xff]
    %v181 = vld [vmem:[#allocation5 + $0x288] sm:$0xff]
    %v182 = vld [vmem:[#allocation5 + $0x290] sm:$0xff]
    %v183 = vld [vmem:[#allocation5 + $0x298] sm:$0xff]
    %v184 = vld [vmem:[#allocation5 + $0x2a0] sm:$0xff]
    %v185 = vld [vmem:[#allocation5 + $0x2a8] sm:$0xff]
    %v186 = vld [vmem:[#allocation5 + $0x2b0] sm:$0xff]
    %v187 = vld [vmem:[#allocation5 + $0x2b8] sm:$0xff]
    %v188 = vld [vmem:[#allocation5 + $0x2c0] sm:$0xff]
    %v189 = vld [vmem:[#allocation5 + $0x2c8] sm:$0xff]
    %v190 = vld [vmem:[#allocation5 + $0x2d0] sm:$0xff]
    %v191 = vld [vmem:[#allocation5 + $0x2d8] sm:$0xff]
    %v192 = vld [vmem:[#allocation5 + $0x2e0] sm:$0xff]
    %v193 = vld [vmem:[#allocation5 + $0x2e8] sm:$0xff]
    %v194 = vld [vmem:[#allocation5 + $0x2f0] sm:$0xff]
    %v195 = vld [vmem:[#allocation5 + $0x2f8] sm:$0xff]
    %v196 = vld [vmem:[#allocation5 + $0x300] sm:$0xff]
    %v197 = vld [vmem:[#allocation5 + $0x308] sm:$0xff]
    %v198 = vld [vmem:[#allocation5 + $0x310] sm:$0xff]
    %v199 = vld [vmem:[#allocation5 + $0x318] sm:$0xff]
    %v200 = vld [vmem:[#allocation5 + $0x320] sm:$0xff]
    %v201 = vld [vmem:[#allocation5 + $0x328] sm:$0xff]
    %v202 = vld [vmem:[#allocation5 + $0x330] sm:$0xff]
    %v203 = vld [vmem:[#allocation5 + $0x338] sm:$0xff]
    %v204 = vld [vmem:[#allocation5 + $0x340] sm:$0xff]
    %v205 = vld [vmem:[#allocation5 + $0x348] sm:$0xff]
    %v206 = vld [vmem:[#allocation5 + $0x350] sm:$0xff]
    %v207 = vld [vmem:[#allocation5 + $0x358] sm:$0xff]
    %v208 = vld [vmem:[#allocation5 + $0x360] sm:$0xff]
    %v209 = vld [vmem:[#allocation5 + $0x368] sm:$0xff]
    %v210 = vld [vmem:[#allocation5 + $0x370] sm:$0xff]
    %v211 = vld [vmem:[#allocation5 + $0x378] sm:$0xff]
    %v212 = vld [vmem:[#allocation5 + $0x380] sm:$0xff]
    %v213 = vld [vmem:[#allocation5 + $0x388] sm:$0xff]
    %v214 = vld [vmem:[#allocation5 + $0x390] sm:$0xff]
    %v215 = vld [vmem:[#allocation5 + $0x398] sm:$0xff]
    %v216 = vld [vmem:[#allocation5 + $0x3a0] sm:$0xff]
    %v217 = vld [vmem:[#allocation5 + $0x3a8] sm:$0xff]
    %v218 = vld [vmem:[#allocation5 + $0x3b0] sm:$0xff]
    %v219 = vld [vmem:[#allocation5 + $0x3b8] sm:$0xff]
    %v220 = vld [vmem:[#allocation5 + $0x3c0] sm:$0xff]
    %v221 = vld [vmem:[#allocation5 + $0x3c8] sm:$0xff]
    %v222 = vld [vmem:[#allocation5 + $0x3d0] sm:$0xff]
    %v223 = vld [vmem:[#allocation5 + $0x3d8] sm:$0xff]
    %v224 = vld [vmem:[#allocation5 + $0x3e0] sm:$0xff]
    %v225 = vld [vmem:[#allocation5 + $0x3e8] sm:$0xff]
    %v226 = vld [vmem:[#allocation5 + $0x3f0] sm:$0xff]
    %v227 = vld [vmem:[#allocation5 + $0x3f8] sm:$0xff]
    %v228 = vld [vmem:[#allocation5 + $0x400] sm:$0xff]
    %v229 = vld [vmem:[#allocation5 + $0x408] sm:$0xff]
    %v230 = vld [vmem:[#allocation5 + $0x410] sm:$0xff]
    %v231 = vld [vmem:[#allocation5 + $0x418] sm:$0xff]
    %v232 = vld [vmem:[#allocation5 + $0x420] sm:$0xff]
    %v233 = vld [vmem:[#allocation5 + $0x428] sm:$0xff]
    %v234 = vld [vmem:[#allocation5 + $0x430] sm:$0xff]
    %v235 = vld [vmem:[#allocation5 + $0x438] sm:$0xff]
    %v236 = vld [vmem:[#allocation5 + $0x440] sm:$0xff]
    %v237 = vld [vmem:[#allocation5 + $0x448] sm:$0xff]
    %v238 = vld [vmem:[#allocation5 + $0x450] sm:$0xff]
    %v239 = vld [vmem:[#allocation5 + $0x458] sm:$0xff]
    %v240 = vld [vmem:[#allocation5 + $0x460] sm:$0xff]
    %v241 = vld [vmem:[#allocation5 + $0x468] sm:$0xff]
    %v242 = vld [vmem:[#allocation5 + $0x470] sm:$0xff]
    %v243 = vld [vmem:[#allocation5 + $0x478] sm:$0xff]
    %v244 = vld [vmem:[#allocation5 + $0x480] sm:$0xff]
    %v245 = vld [vmem:[#allocation5 + $0x488] sm:$0xff]
    %v246 = vld [vmem:[#allocation5 + $0x490] sm:$0xff]
    %v247 = vld [vmem:[#allocation5 + $0x498] sm:$0xff]
    %v248 = vld [vmem:[#allocation5 + $0x4a0] sm:$0xff]
    %v249 = vld [vmem:[#allocation5 + $0x4a8] sm:$0xff]
    %v250 = vld [vmem:[#allocation5 + $0x4b0] sm:$0xff]
    %v251 = vld [vmem:[#allocation5 + $0x4b8] sm:$0xff]
    %v252 = vld [vmem:[#allocation5 + $0x4c0] sm:$0xff]
    %v253 = vld [vmem:[#allocation5 + $0x4c8] sm:$0xff]
    %v254 = vld [vmem:[#allocation5 + $0x4d0] sm:$0xff]
    %v255 = vld [vmem:[#allocation5 + $0x4d8] sm:$0xff]
    %v256 = vld [vmem:[#allocation5 + $0x4e0] sm:$0xff]
    %v257 = vld [vmem:[#allocation5 + $0x4e8] sm:$0xff]
    %v258 = vld [vmem:[#allocation5 + $0x4f0] sm:$0xff]
    %v259 = vld [vmem:[#allocation5 + $0x4f8] sm:$0xff]
    %v260 = vld [vmem:[#allocation5 + $0x500] sm:$0xff]
    %v261 = vld [vmem:[#allocation5 + $0x508] sm:$0xff]
    %v262 = vld [vmem:[#allocation5 + $0x510] sm:$0xff]
    %v263 = vld [vmem:[#allocation5 + $0x518] sm:$0xff]
    %v264 = vld [vmem:[#allocation5 + $0x520] sm:$0xff]
    %v265 = vld [vmem:[#allocation5 + $0x528] sm:$0xff]
    %v266 = vld [vmem:[#allocation5 + $0x530] sm:$0xff]
    %v267 = vld [vmem:[#allocation5 + $0x538] sm:$0xff]
    %v268 = vld [vmem:[#allocation5 + $0x540] sm:$0xff]
    %v269 = vld [vmem:[#allocation5 + $0x548] sm:$0xff]
    %v270 = vld [vmem:[#allocation5 + $0x550] sm:$0xff]
    %v271 = vld [vmem:[#allocation5 + $0x558] sm:$0xff]
    %v272 = vld [vmem:[#allocation5 + $0x560] sm:$0xff]
    %v273 = vld [vmem:[#allocation5 + $0x568] sm:$0xff]
    %v274 = vld [vmem:[#allocation5 + $0x570] sm:$0xff]
    %v275 = vld [vmem:[#allocation5 + $0x578] sm:$0xff]
    %v276 = vld [vmem:[#allocation5 + $0x580] sm:$0xff]
    %v277 = vld [vmem:[#allocation5 + $0x588] sm:$0xff]
    %v278 = vld [vmem:[#allocation5 + $0x590] sm:$0xff]
    %v279 = vld [vmem:[#allocation5 + $0x598] sm:$0xff]
    %v280 = vld [vmem:[#allocation5 + $0x5a0] sm:$0xff]
    %v281 = vld [vmem:[#allocation5 + $0x5a8] sm:$0xff]
    %v282 = vld [vmem:[#allocation5 + $0x5b0] sm:$0xff]
    %v283 = vld [vmem:[#allocation5 + $0x5b8] sm:$0xff]
    %v284 = vld [vmem:[#allocation5 + $0x5c0] sm:$0xff]
    %v285 = vld [vmem:[#allocation5 + $0x5c8] sm:$0xff]
    %v286 = vld [vmem:[#allocation5 + $0x5d0] sm:$0xff]
    %v287 = vld [vmem:[#allocation5 + $0x5d8] sm:$0xff]
    %v288 = vld [vmem:[#allocation5 + $0x5e0] sm:$0xff]
    %v289 = vld [vmem:[#allocation5 + $0x5e8] sm:$0xff]
    %v290 = vld [vmem:[#allocation5 + $0x5f0] sm:$0xff]
    %v291 = vld [vmem:[#allocation5 + $0x5f8] sm:$0xff]
    %v292 = vld [vmem:[#allocation7] sm:$0xf]
    %v294 = vlaneseq
    %v295 = vshrl.u32 %v294, 7
    %v296 = vsub.s32 0, %v295
    %v297 = vrot.slane %v292, %v296
    %v298 = vlaneseq
    %v299 = vshrl.u32 %v298, 7
    %v300 = vsub.s32 1, %v299
    %v301 = vrot.slane %v292, %v300
    %v302 = vlaneseq
    %v303 = vshrl.u32 %v302, 7
    %v304 = vsub.s32 2, %v303
    %v305 = vrot.slane %v292, %v304
    %v306 = vlaneseq
    %v307 = vshrl.u32 %v306, 7
    %v308 = vsub.s32 3, %v307
    %v309 = vrot.slane %v292, %v308
    %v320 = vunpack.c.l.b16 %v94
    %v321 = vunpack.c.h.b16 %v94
    %v322 = vunpack.c.l.b16 %v95
    %v323 = vunpack.c.h.b16 %v95
    %v324 = vunpack.c.l.b16 %v96
    %v325 = vunpack.c.h.b16 %v96
    %v326 = vunpack.c.l.b16 %v97
    %v327 = vunpack.c.h.b16 %v97
    %v328 = vunpack.c.l.b16 %v98
    %v329 = vunpack.c.h.b16 %v98
    %v330 = vunpack.c.l.b16 %v99
    %v331 = vunpack.c.h.b16 %v99
    %v332 = vpack.c.b16 %v326, %v320
    %v333 = vpack.c.b16 %v327, %v321
    %v334 = vpack.c.b16 %v328, %v322
    %v335 = vpack.c.b16 %v329, %v323
    %v336 = vpack.c.b16 %v330, %v324
    %v337 = vpack.c.b16 %v331, %v325
    %v536 = vunpack.c.l.b16 %v100
    %v537 = vunpack.c.h.b16 %v100
    %v538 = vunpack.c.l.b16 %v101
    %v539 = vunpack.c.h.b16 %v101
    %v540 = vunpack.c.l.b16 %v102
    %v541 = vunpack.c.h.b16 %v102
    %v542 = vunpack.c.l.b16 %v103
    %v543 = vunpack.c.h.b16 %v103
    %v544 = vunpack.c.l.b16 %v104
    %v545 = vunpack.c.h.b16 %v104
    %v546 = vunpack.c.l.b16 %v105
    %v547 = vunpack.c.h.b16 %v105
    %v548 = vunpack.c.l.b16 %v106
    %v549 = vunpack.c.h.b16 %v106
    %v550 = vunpack.c.l.b16 %v107
    %v551 = vunpack.c.h.b16 %v107
    %v552 = vunpack.c.l.b16 %v108
    %v553 = vunpack.c.h.b16 %v108
    %v554 = vunpack.c.l.b16 %v109
    %v555 = vunpack.c.h.b16 %v109
    %v556 = vunpack.c.l.b16 %v110
    %v557 = vunpack.c.h.b16 %v110
    %v558 = vunpack.c.l.b16 %v111
    %v559 = vunpack.c.h.b16 %v111
    %v560 = vunpack.c.l.b16 %v112
    %v561 = vunpack.c.h.b16 %v112
    %v562 = vunpack.c.l.b16 %v113
    %v563 = vunpack.c.h.b16 %v113
    %v564 = vunpack.c.l.b16 %v114
    %v565 = vunpack.c.h.b16 %v114
    %v566 = vunpack.c.l.b16 %v115
    %v567 = vunpack.c.h.b16 %v115
    %v568 = vunpack.c.l.b16 %v116
    %v569 = vunpack.c.h.b16 %v116
    %v570 = vunpack.c.l.b16 %v117
    %v571 = vunpack.c.h.b16 %v117
    %v572 = vunpack.c.l.b16 %v118
    %v573 = vunpack.c.h.b16 %v118
    %v574 = vunpack.c.l.b16 %v119
    %v575 = vunpack.c.h.b16 %v119
    %v576 = vunpack.c.l.b16 %v120
    %v577 = vunpack.c.h.b16 %v120
    %v578 = vunpack.c.l.b16 %v121
    %v579 = vunpack.c.h.b16 %v121
    %v580 = vunpack.c.l.b16 %v122
    %v581 = vunpack.c.h.b16 %v122
    %v582 = vunpack.c.l.b16 %v123
    %v583 = vunpack.c.h.b16 %v123
    %v584 = vunpack.c.l.b16 %v124
    %v585 = vunpack.c.h.b16 %v124
    %v586 = vunpack.c.l.b16 %v125
    %v587 = vunpack.c.h.b16 %v125
    %v588 = vunpack.c.l.b16 %v126
    %v589 = vunpack.c.h.b16 %v126
    %v590 = vunpack.c.l.b16 %v127
    %v591 = vunpack.c.h.b16 %v127
    %v592 = vunpack.c.l.b16 %v128
    %v593 = vunpack.c.h.b16 %v128
    %v594 = vunpack.c.l.b16 %v129
    %v595 = vunpack.c.h.b16 %v129
    %v596 = vunpack.c.l.b16 %v130
    %v597 = vunpack.c.h.b16 %v130
    %v598 = vunpack.c.l.b16 %v131
    %v599 = vunpack.c.h.b16 %v131
    %v600 = vunpack.c.l.b16 %v132
    %v601 = vunpack.c.h.b16 %v132
    %v602 = vunpack.c.l.b16 %v133
    %v603 = vunpack.c.h.b16 %v133
    %v604 = vunpack.c.l.b16 %v134
    %v605 = vunpack.c.h.b16 %v134
    %v606 = vunpack.c.l.b16 %v135
    %v607 = vunpack.c.h.b16 %v135
    %v608 = vunpack.c.l.b16 %v136
    %v609 = vunpack.c.h.b16 %v136
    %v610 = vunpack.c.l.b16 %v137
    %v611 = vunpack.c.h.b16 %v137
    %v612 = vunpack.c.l.b16 %v138
    %v613 = vunpack.c.h.b16 %v138
    %v614 = vunpack.c.l.b16 %v139
    %v615 = vunpack.c.h.b16 %v139
    %v616 = vunpack.c.l.b16 %v140
    %v617 = vunpack.c.h.b16 %v140
    %v618 = vunpack.c.l.b16 %v141
    %v619 = vunpack.c.h.b16 %v141
    %v620 = vunpack.c.l.b16 %v142
    %v621 = vunpack.c.h.b16 %v142
    %v622 = vunpack.c.l.b16 %v143
    %v623 = vunpack.c.h.b16 %v143
    %v624 = vunpack.c.l.b16 %v144
    %v625 = vunpack.c.h.b16 %v144
    %v626 = vunpack.c.l.b16 %v145
    %v627 = vunpack.c.h.b16 %v145
    %v628 = vunpack.c.l.b16 %v146
    %v629 = vunpack.c.h.b16 %v146
    %v630 = vunpack.c.l.b16 %v147
    %v631 = vunpack.c.h.b16 %v147
    %v632 = vunpack.c.l.b16 %v148
    %v633 = vunpack.c.h.b16 %v148
    %v634 = vunpack.c.l.b16 %v149
    %v635 = vunpack.c.h.b16 %v149
    %v636 = vunpack.c.l.b16 %v150
    %v637 = vunpack.c.h.b16 %v150
    %v638 = vunpack.c.l.b16 %v151
    %v639 = vunpack.c.h.b16 %v151
    %v640 = vunpack.c.l.b16 %v152
    %v641 = vunpack.c.h.b16 %v152
    %v642 = vunpack.c.l.b16 %v153
    %v643 = vunpack.c.h.b16 %v153
    %v644 = vunpack.c.l.b16 %v154
    %v645 = vunpack.c.h.b16 %v154
    %v646 = vunpack.c.l.b16 %v155
    %v647 = vunpack.c.h.b16 %v155
    %v648 = vunpack.c.l.b16 %v156
    %v649 = vunpack.c.h.b16 %v156
    %v650 = vunpack.c.l.b16 %v157
    %v651 = vunpack.c.h.b16 %v157
    %v652 = vunpack.c.l.b16 %v158
    %v653 = vunpack.c.h.b16 %v158
    %v654 = vunpack.c.l.b16 %v159
    %v655 = vunpack.c.h.b16 %v159
    %v656 = vunpack.c.l.b16 %v160
    %v657 = vunpack.c.h.b16 %v160
    %v658 = vunpack.c.l.b16 %v161
    %v659 = vunpack.c.h.b16 %v161
    %v660 = vunpack.c.l.b16 %v162
    %v661 = vunpack.c.h.b16 %v162
    %v662 = vunpack.c.l.b16 %v163
    %v663 = vunpack.c.h.b16 %v163
    %v664 = vunpack.c.l.b16 %v164
    %v665 = vunpack.c.h.b16 %v164
    %v666 = vunpack.c.l.b16 %v165
    %v667 = vunpack.c.h.b16 %v165
    %v668 = vunpack.c.l.b16 %v166
    %v669 = vunpack.c.h.b16 %v166
    %v670 = vunpack.c.l.b16 %v167
    %v671 = vunpack.c.h.b16 %v167
    %v672 = vunpack.c.l.b16 %v168
    %v673 = vunpack.c.h.b16 %v168
    %v674 = vunpack.c.l.b16 %v169
    %v675 = vunpack.c.h.b16 %v169
    %v676 = vunpack.c.l.b16 %v170
    %v677 = vunpack.c.h.b16 %v170
    %v678 = vunpack.c.l.b16 %v171
    %v679 = vunpack.c.h.b16 %v171
    %v680 = vunpack.c.l.b16 %v172
    %v681 = vunpack.c.h.b16 %v172
    %v682 = vunpack.c.l.b16 %v173
    %v683 = vunpack.c.h.b16 %v173
    %v684 = vunpack.c.l.b16 %v174
    %v685 = vunpack.c.h.b16 %v174
    %v686 = vunpack.c.l.b16 %v175
    %v687 = vunpack.c.h.b16 %v175
    %v688 = vunpack.c.l.b16 %v176
    %v689 = vunpack.c.h.b16 %v176
    %v690 = vunpack.c.l.b16 %v177
    %v691 = vunpack.c.h.b16 %v177
    %v692 = vunpack.c.l.b16 %v178
    %v693 = vunpack.c.h.b16 %v178
    %v694 = vunpack.c.l.b16 %v179
    %v695 = vunpack.c.h.b16 %v179
    %v696 = vunpack.c.l.b16 %v180
    %v697 = vunpack.c.h.b16 %v180
    %v698 = vunpack.c.l.b16 %v181
    %v699 = vunpack.c.h.b16 %v181
    %v700 = vunpack.c.l.b16 %v182
    %v701 = vunpack.c.h.b16 %v182
    %v702 = vunpack.c.l.b16 %v183
    %v703 = vunpack.c.h.b16 %v183
    %v704 = vunpack.c.l.b16 %v184
    %v705 = vunpack.c.h.b16 %v184
    %v706 = vunpack.c.l.b16 %v185
    %v707 = vunpack.c.h.b16 %v185
    %v708 = vunpack.c.l.b16 %v186
    %v709 = vunpack.c.h.b16 %v186
    %v710 = vunpack.c.l.b16 %v187
    %v711 = vunpack.c.h.b16 %v187
    %v712 = vunpack.c.l.b16 %v188
    %v713 = vunpack.c.h.b16 %v188
    %v714 = vunpack.c.l.b16 %v189
    %v715 = vunpack.c.h.b16 %v189
    %v716 = vunpack.c.l.b16 %v190
    %v717 = vunpack.c.h.b16 %v190
    %v718 = vunpack.c.l.b16 %v191
    %v719 = vunpack.c.h.b16 %v191
    %v720 = vunpack.c.l.b16 %v192
    %v721 = vunpack.c.h.b16 %v192
    %v722 = vunpack.c.l.b16 %v193
    %v723 = vunpack.c.h.b16 %v193
    %v724 = vunpack.c.l.b16 %v194
    %v725 = vunpack.c.h.b16 %v194
    %v726 = vunpack.c.l.b16 %v195
    %v727 = vunpack.c.h.b16 %v195
    %v728 = vunpack.c.l.b16 %v196
    %v729 = vunpack.c.h.b16 %v196
    %v730 = vunpack.c.l.b16 %v197
    %v731 = vunpack.c.h.b16 %v197
    %v732 = vunpack.c.l.b16 %v198
    %v733 = vunpack.c.h.b16 %v198
    %v734 = vunpack.c.l.b16 %v199
    %v735 = vunpack.c.h.b16 %v199
    %v736 = vunpack.c.l.b16 %v200
    %v737 = vunpack.c.h.b16 %v200
    %v738 = vunpack.c.l.b16 %v201
    %v739 = vunpack.c.h.b16 %v201
    %v740 = vunpack.c.l.b16 %v202
    %v741 = vunpack.c.h.b16 %v202
    %v742 = vunpack.c.l.b16 %v203
    %v743 = vunpack.c.h.b16 %v203
    %v744 = vunpack.c.l.b16 %v204
    %v745 = vunpack.c.h.b16 %v204
    %v746 = vunpack.c.l.b16 %v205
    %v747 = vunpack.c.h.b16 %v205
    %v748 = vunpack.c.l.b16 %v206
    %v749 = vunpack.c.h.b16 %v206
    %v750 = vunpack.c.l.b16 %v207
    %v751 = vunpack.c.h.b16 %v207
    %v752 = vunpack.c.l.b16 %v208
    %v753 = vunpack.c.h.b16 %v208
    %v754 = vunpack.c.l.b16 %v209
    %v755 = vunpack.c.h.b16 %v209
    %v756 = vunpack.c.l.b16 %v210
    %v757 = vunpack.c.h.b16 %v210
    %v758 = vunpack.c.l.b16 %v211
    %v759 = vunpack.c.h.b16 %v211
    %v760 = vunpack.c.l.b16 %v212
    %v761 = vunpack.c.h.b16 %v212
    %v762 = vunpack.c.l.b16 %v213
    %v763 = vunpack.c.h.b16 %v213
    %v764 = vunpack.c.l.b16 %v214
    %v765 = vunpack.c.h.b16 %v214
    %v766 = vunpack.c.l.b16 %v215
    %v767 = vunpack.c.h.b16 %v215
    %v768 = vunpack.c.l.b16 %v216
    %v769 = vunpack.c.h.b16 %v216
    %v770 = vunpack.c.l.b16 %v217
    %v771 = vunpack.c.h.b16 %v217
    %v772 = vunpack.c.l.b16 %v218
    %v773 = vunpack.c.h.b16 %v218
    %v774 = vunpack.c.l.b16 %v219
    %v775 = vunpack.c.h.b16 %v219
    %v776 = vunpack.c.l.b16 %v220
    %v777 = vunpack.c.h.b16 %v220
    %v778 = vunpack.c.l.b16 %v221
    %v779 = vunpack.c.h.b16 %v221
    %v780 = vunpack.c.l.b16 %v222
    %v781 = vunpack.c.h.b16 %v222
    %v782 = vunpack.c.l.b16 %v223
    %v783 = vunpack.c.h.b16 %v223
    %v784 = vunpack.c.l.b16 %v224
    %v785 = vunpack.c.h.b16 %v224
    %v786 = vunpack.c.l.b16 %v225
    %v787 = vunpack.c.h.b16 %v225
    %v788 = vunpack.c.l.b16 %v226
    %v789 = vunpack.c.h.b16 %v226
    %v790 = vunpack.c.l.b16 %v227
    %v791 = vunpack.c.h.b16 %v227
    %v792 = vunpack.c.l.b16 %v228
    %v793 = vunpack.c.h.b16 %v228
    %v794 = vunpack.c.l.b16 %v229
    %v795 = vunpack.c.h.b16 %v229
    %v796 = vunpack.c.l.b16 %v230
    %v797 = vunpack.c.h.b16 %v230
    %v798 = vunpack.c.l.b16 %v231
    %v799 = vunpack.c.h.b16 %v231
    %v800 = vunpack.c.l.b16 %v232
    %v801 = vunpack.c.h.b16 %v232
    %v802 = vunpack.c.l.b16 %v233
    %v803 = vunpack.c.h.b16 %v233
    %v804 = vunpack.c.l.b16 %v234
    %v805 = vunpack.c.h.b16 %v234
    %v806 = vunpack.c.l.b16 %v235
    %v807 = vunpack.c.h.b16 %v235
    %v808 = vunpack.c.l.b16 %v236
    %v809 = vunpack.c.h.b16 %v236
    %v810 = vunpack.c.l.b16 %v237
    %v811 = vunpack.c.h.b16 %v237
    %v812 = vunpack.c.l.b16 %v238
    %v813 = vunpack.c.h.b16 %v238
    %v814 = vunpack.c.l.b16 %v239
    %v815 = vunpack.c.h.b16 %v239
    %v816 = vunpack.c.l.b16 %v240
    %v817 = vunpack.c.h.b16 %v240
    %v818 = vunpack.c.l.b16 %v241
    %v819 = vunpack.c.h.b16 %v241
    %v820 = vunpack.c.l.b16 %v242
    %v821 = vunpack.c.h.b16 %v242
    %v822 = vunpack.c.l.b16 %v243
    %v823 = vunpack.c.h.b16 %v243
    %v824 = vunpack.c.l.b16 %v244
    %v825 = vunpack.c.h.b16 %v244
    %v826 = vunpack.c.l.b16 %v245
    %v827 = vunpack.c.h.b16 %v245
    %v828 = vunpack.c.l.b16 %v246
    %v829 = vunpack.c.h.b16 %v246
    %v830 = vunpack.c.l.b16 %v247
    %v831 = vunpack.c.h.b16 %v247
    %v832 = vunpack.c.l.b16 %v248
    %v833 = vunpack.c.h.b16 %v248
    %v834 = vunpack.c.l.b16 %v249
    %v835 = vunpack.c.h.b16 %v249
    %v836 = vunpack.c.l.b16 %v250
    %v837 = vunpack.c.h.b16 %v250
    %v838 = vunpack.c.l.b16 %v251
    %v839 = vunpack.c.h.b16 %v251
    %v840 = vunpack.c.l.b16 %v252
    %v841 = vunpack.c.h.b16 %v252
    %v842 = vunpack.c.l.b16 %v253
    %v843 = vunpack.c.h.b16 %v253
    %v844 = vunpack.c.l.b16 %v254
    %v845 = vunpack.c.h.b16 %v254
    %v846 = vunpack.c.l.b16 %v255
    %v847 = vunpack.c.h.b16 %v255
    %v848 = vunpack.c.l.b16 %v256
    %v849 = vunpack.c.h.b16 %v256
    %v850 = vunpack.c.l.b16 %v257
    %v851 = vunpack.c.h.b16 %v257
    %v852 = vunpack.c.l.b16 %v258
    %v853 = vunpack.c.h.b16 %v258
    %v854 = vunpack.c.l.b16 %v259
    %v855 = vunpack.c.h.b16 %v259
    %v856 = vunpack.c.l.b16 %v260
    %v857 = vunpack.c.h.b16 %v260
    %v858 = vunpack.c.l.b16 %v261
    %v859 = vunpack.c.h.b16 %v261
    %v860 = vunpack.c.l.b16 %v262
    %v861 = vunpack.c.h.b16 %v262
    %v862 = vunpack.c.l.b16 %v263
    %v863 = vunpack.c.h.b16 %v263
    %v864 = vunpack.c.l.b16 %v264
    %v865 = vunpack.c.h.b16 %v264
    %v866 = vunpack.c.l.b16 %v265
    %v867 = vunpack.c.h.b16 %v265
    %v868 = vunpack.c.l.b16 %v266
    %v869 = vunpack.c.h.b16 %v266
    %v870 = vunpack.c.l.b16 %v267
    %v871 = vunpack.c.h.b16 %v267
    %v872 = vunpack.c.l.b16 %v268
    %v873 = vunpack.c.h.b16 %v268
    %v874 = vunpack.c.l.b16 %v269
    %v875 = vunpack.c.h.b16 %v269
    %v876 = vunpack.c.l.b16 %v270
    %v877 = vunpack.c.h.b16 %v270
    %v878 = vunpack.c.l.b16 %v271
    %v879 = vunpack.c.h.b16 %v271
    %v880 = vunpack.c.l.b16 %v272
    %v881 = vunpack.c.h.b16 %v272
    %v882 = vunpack.c.l.b16 %v273
    %v883 = vunpack.c.h.b16 %v273
    %v884 = vunpack.c.l.b16 %v274
    %v885 = vunpack.c.h.b16 %v274
    %v886 = vunpack.c.l.b16 %v275
    %v887 = vunpack.c.h.b16 %v275
    %v888 = vunpack.c.l.b16 %v276
    %v889 = vunpack.c.h.b16 %v276
    %v890 = vunpack.c.l.b16 %v277
    %v891 = vunpack.c.h.b16 %v277
    %v892 = vunpack.c.l.b16 %v278
    %v893 = vunpack.c.h.b16 %v278
    %v894 = vunpack.c.l.b16 %v279
    %v895 = vunpack.c.h.b16 %v279
    %v896 = vunpack.c.l.b16 %v280
    %v897 = vunpack.c.h.b16 %v280
    %v898 = vunpack.c.l.b16 %v281
    %v899 = vunpack.c.h.b16 %v281
    %v900 = vunpack.c.l.b16 %v282
    %v901 = vunpack.c.h.b16 %v282
    %v902 = vunpack.c.l.b16 %v283
    %v903 = vunpack.c.h.b16 %v283
    %v904 = vunpack.c.l.b16 %v284
    %v905 = vunpack.c.h.b16 %v284
    %v906 = vunpack.c.l.b16 %v285
    %v907 = vunpack.c.h.b16 %v285
    %v908 = vunpack.c.l.b16 %v286
    %v909 = vunpack.c.h.b16 %v286
    %v910 = vunpack.c.l.b16 %v287
    %v911 = vunpack.c.h.b16 %v287
    %v912 = vunpack.c.l.b16 %v288
    %v913 = vunpack.c.h.b16 %v288
    %v914 = vunpack.c.l.b16 %v289
    %v915 = vunpack.c.h.b16 %v289
    %v916 = vunpack.c.l.b16 %v290
    %v917 = vunpack.c.h.b16 %v290
    %v918 = vunpack.c.l.b16 %v291
    %v919 = vunpack.c.h.b16 %v291
    %v920 = vpack.c.b16 %v540, %v536
    %v921 = vpack.c.b16 %v541, %v537
    %v922 = vpack.c.b16 %v542, %v538
    %v923 = vpack.c.b16 %v543, %v539
    %v924 = vpack.c.b16 %v548, %v544
    %v925 = vpack.c.b16 %v549, %v545
    %v926 = vpack.c.b16 %v550, %v546
    %v927 = vpack.c.b16 %v551, %v547
    %v928 = vpack.c.b16 %v556, %v552
    %v929 = vpack.c.b16 %v557, %v553
    %v930 = vpack.c.b16 %v558, %v554
    %v931 = vpack.c.b16 %v559, %v555
    %v932 = vpack.c.b16 %v564, %v560
    %v933 = vpack.c.b16 %v565, %v561
    %v934 = vpack.c.b16 %v566, %v562
    %v935 = vpack.c.b16 %v567, %v563
    %v936 = vpack.c.b16 %v572, %v568
    %v937 = vpack.c.b16 %v573, %v569
    %v938 = vpack.c.b16 %v574, %v570
    %v939 = vpack.c.b16 %v575, %v571
    %v940 = vpack.c.b16 %v580, %v576
    %v941 = vpack.c.b16 %v581, %v577
    %v942 = vpack.c.b16 %v582, %v578
    %v943 = vpack.c.b16 %v583, %v579
    %v944 = vpack.c.b16 %v588, %v584
    %v945 = vpack.c.b16 %v589, %v585
    %v946 = vpack.c.b16 %v590, %v586
    %v947 = vpack.c.b16 %v591, %v587
    %v948 = vpack.c.b16 %v596, %v592
    %v949 = vpack.c.b16 %v597, %v593
    %v950 = vpack.c.b16 %v598, %v594
    %v951 = vpack.c.b16 %v599, %v595
    %v952 = vpack.c.b16 %v604, %v600
    %v953 = vpack.c.b16 %v605, %v601
    %v954 = vpack.c.b16 %v606, %v602
    %v955 = vpack.c.b16 %v607, %v603
    %v956 = vpack.c.b16 %v612, %v608
    %v957 = vpack.c.b16 %v613, %v609
    %v958 = vpack.c.b16 %v614, %v610
    %v959 = vpack.c.b16 %v615, %v611
    %v960 = vpack.c.b16 %v620, %v616
    %v961 = vpack.c.b16 %v621, %v617
    %v962 = vpack.c.b16 %v622, %v618
    %v963 = vpack.c.b16 %v623, %v619
    %v964 = vpack.c.b16 %v628, %v624
    %v965 = vpack.c.b16 %v629, %v625
    %v966 = vpack.c.b16 %v630, %v626
    %v967 = vpack.c.b16 %v631, %v627
    %v968 = vpack.c.b16 %v636, %v632
    %v969 = vpack.c.b16 %v637, %v633
    %v970 = vpack.c.b16 %v638, %v634
    %v971 = vpack.c.b16 %v639, %v635
    %v972 = vpack.c.b16 %v644, %v640
    %v973 = vpack.c.b16 %v645, %v641
    %v974 = vpack.c.b16 %v646, %v642
    %v975 = vpack.c.b16 %v647, %v643
    %v976 = vpack.c.b16 %v652, %v648
    %v977 = vpack.c.b16 %v653, %v649
    %v978 = vpack.c.b16 %v654, %v650
    %v979 = vpack.c.b16 %v655, %v651
    %v980 = vpack.c.b16 %v660, %v656
    %v981 = vpack.c.b16 %v661, %v657
    %v982 = vpack.c.b16 %v662, %v658
    %v983 = vpack.c.b16 %v663, %v659
    %v984 = vpack.c.b16 %v668, %v664
    %v985 = vpack.c.b16 %v669, %v665
    %v986 = vpack.c.b16 %v670, %v666
    %v987 = vpack.c.b16 %v671, %v667
    %v988 = vpack.c.b16 %v676, %v672
    %v989 = vpack.c.b16 %v677, %v673
    %v990 = vpack.c.b16 %v678, %v674
    %v991 = vpack.c.b16 %v679, %v675
    %v992 = vpack.c.b16 %v684, %v680
    %v993 = vpack.c.b16 %v685, %v681
    %v994 = vpack.c.b16 %v686, %v682
    %v995 = vpack.c.b16 %v687, %v683
    %v996 = vpack.c.b16 %v692, %v688
    %v997 = vpack.c.b16 %v693, %v689
    %v998 = vpack.c.b16 %v694, %v690
    %v999 = vpack.c.b16 %v695, %v691
    %v1000 = vpack.c.b16 %v700, %v696
    %v1001 = vpack.c.b16 %v701, %v697
    %v1002 = vpack.c.b16 %v702, %v698
    %v1003 = vpack.c.b16 %v703, %v699
    %v1004 = vpack.c.b16 %v708, %v704
    %v1005 = vpack.c.b16 %v709, %v705
    %v1006 = vpack.c.b16 %v710, %v706
    %v1007 = vpack.c.b16 %v711, %v707
    %v1008 = vpack.c.b16 %v716, %v712
    %v1009 = vpack.c.b16 %v717, %v713
    %v1010 = vpack.c.b16 %v718, %v714
    %v1011 = vpack.c.b16 %v719, %v715
    %v1012 = vpack.c.b16 %v724, %v720
    %v1013 = vpack.c.b16 %v725, %v721
    %v1014 = vpack.c.b16 %v726, %v722
    %v1015 = vpack.c.b16 %v727, %v723
    %v1016 = vpack.c.b16 %v732, %v728
    %v1017 = vpack.c.b16 %v733, %v729
    %v1018 = vpack.c.b16 %v734, %v730
    %v1019 = vpack.c.b16 %v735, %v731
    %v1020 = vpack.c.b16 %v740, %v736
    %v1021 = vpack.c.b16 %v741, %v737
    %v1022 = vpack.c.b16 %v742, %v738
    %v1023 = vpack.c.b16 %v743, %v739
    %v1024 = vpack.c.b16 %v748, %v744
    %v1025 = vpack.c.b16 %v749, %v745
    %v1026 = vpack.c.b16 %v750, %v746
    %v1027 = vpack.c.b16 %v751, %v747
    %v1028 = vpack.c.b16 %v756, %v752
    %v1029 = vpack.c.b16 %v757, %v753
    %v1030 = vpack.c.b16 %v758, %v754
    %v1031 = vpack.c.b16 %v759, %v755
    %v1032 = vpack.c.b16 %v764, %v760
    %v1033 = vpack.c.b16 %v765, %v761
    %v1034 = vpack.c.b16 %v766, %v762
    %v1035 = vpack.c.b16 %v767, %v763
    %v1036 = vpack.c.b16 %v772, %v768
    %v1037 = vpack.c.b16 %v773, %v769
    %v1038 = vpack.c.b16 %v774, %v770
    %v1039 = vpack.c.b16 %v775, %v771
    %v1040 = vpack.c.b16 %v780, %v776
    %v1041 = vpack.c.b16 %v781, %v777
    %v1042 = vpack.c.b16 %v782, %v778
    %v1043 = vpack.c.b16 %v783, %v779
    %v1044 = vpack.c.b16 %v788, %v784
    %v1045 = vpack.c.b16 %v789, %v785
    %v1046 = vpack.c.b16 %v790, %v786
    %v1047 = vpack.c.b16 %v791, %v787
    %v1048 = vpack.c.b16 %v796, %v792
    %v1049 = vpack.c.b16 %v797, %v793
    %v1050 = vpack.c.b16 %v798, %v794
    %v1051 = vpack.c.b16 %v799, %v795
    %v1052 = vpack.c.b16 %v804, %v800
    %v1053 = vpack.c.b16 %v805, %v801
    %v1054 = vpack.c.b16 %v806, %v802
    %v1055 = vpack.c.b16 %v807, %v803
    %v1056 = vpack.c.b16 %v812, %v808
    %v1057 = vpack.c.b16 %v813, %v809
    %v1058 = vpack.c.b16 %v814, %v810
    %v1059 = vpack.c.b16 %v815, %v811
    %v1060 = vpack.c.b16 %v820, %v816
    %v1061 = vpack.c.b16 %v821, %v817
    %v1062 = vpack.c.b16 %v822, %v818
    %v1063 = vpack.c.b16 %v823, %v819
    %v1064 = vpack.c.b16 %v828, %v824
    %v1065 = vpack.c.b16 %v829, %v825
    %v1066 = vpack.c.b16 %v830, %v826
    %v1067 = vpack.c.b16 %v831, %v827
    %v1068 = vpack.c.b16 %v836, %v832
    %v1069 = vpack.c.b16 %v837, %v833
    %v1070 = vpack.c.b16 %v838, %v834
    %v1071 = vpack.c.b16 %v839, %v835
    %v1072 = vpack.c.b16 %v844, %v840
    %v1073 = vpack.c.b16 %v845, %v841
    %v1074 = vpack.c.b16 %v846, %v842
    %v1075 = vpack.c.b16 %v847, %v843
    %v1076 = vpack.c.b16 %v852, %v848
    %v1077 = vpack.c.b16 %v853, %v849
    %v1078 = vpack.c.b16 %v854, %v850
    %v1079 = vpack.c.b16 %v855, %v851
    %v1080 = vpack.c.b16 %v860, %v856
    %v1081 = vpack.c.b16 %v861, %v857
    %v1082 = vpack.c.b16 %v862, %v858
    %v1083 = vpack.c.b16 %v863, %v859
    %v1084 = vpack.c.b16 %v868, %v864
    %v1085 = vpack.c.b16 %v869, %v865
    %v1086 = vpack.c.b16 %v870, %v866
    %v1087 = vpack.c.b16 %v871, %v867
    %v1088 = vpack.c.b16 %v876, %v872
    %v1089 = vpack.c.b16 %v877, %v873
    %v1090 = vpack.c.b16 %v878, %v874
    %v1091 = vpack.c.b16 %v879, %v875
    %v1092 = vpack.c.b16 %v884, %v880
    %v1093 = vpack.c.b16 %v885, %v881
    %v1094 = vpack.c.b16 %v886, %v882
    %v1095 = vpack.c.b16 %v887, %v883
    %v1096 = vpack.c.b16 %v892, %v888
    %v1097 = vpack.c.b16 %v893, %v889
    %v1098 = vpack.c.b16 %v894, %v890
    %v1099 = vpack.c.b16 %v895, %v891
    %v1100 = vpack.c.b16 %v900, %v896
    %v1101 = vpack.c.b16 %v901, %v897
    %v1102 = vpack.c.b16 %v902, %v898
    %v1103 = vpack.c.b16 %v903, %v899
    %v1104 = vpack.c.b16 %v908, %v904
    %v1105 = vpack.c.b16 %v909, %v905
    %v1106 = vpack.c.b16 %v910, %v906
    %v1107 = vpack.c.b16 %v911, %v907
    %v1108 = vpack.c.b16 %v916, %v912
    %v1109 = vpack.c.b16 %v917, %v913
    %v1110 = vpack.c.b16 %v918, %v914
    %v1111 = vpack.c.b16 %v919, %v915
    %1304 = vmatprep.subr.bf16.mxu0 %v949
    %1305 = vmatpush1.bf16.msra.mxu0 %v948
    %1306 = vmatprep.subr.bf16.mxu0 %v945
    %1307 = vmatpush1.bf16.msra.mxu0 %v944
    %1308 = vmatprep.subr.bf16.mxu0 %v941
    %1309 = vmatpush1.bf16.msra.mxu0 %v940
    %1310 = vmatprep.subr.bf16.mxu0 %v937
    %1311 = vmatpush1.bf16.msra.mxu0 %v936
    %1312 = vmatprep.subr.bf16.mxu0 %v933
    %1313 = vmatpush1.bf16.msra.mxu0 %v932
    %1314 = vmatprep.subr.bf16.mxu0 %v929
    %1315 = vmatpush1.bf16.msra.mxu0 %v928
    %1316 = vmatprep.subr.bf16.mxu0 %v925
    %1317 = vmatpush1.bf16.msra.mxu0 %v924
    %1318 = vmatprep.subr.bf16.mxu0 %v921
    %1319 = vmatpush1.bf16.msra.mxu0 %v920
    %1320 = vmatprep.subr.bf16.mxu0 %v981
    %1321 = vmatpush2.bf16.msra.mxu0 %v980
    %1322 = vmatprep.subr.bf16.mxu0 %v977
    %1323 = vmatpush2.bf16.msra.mxu0 %v976
    %1324 = vmatprep.subr.bf16.mxu0 %v973
    %1325 = vmatpush2.bf16.msra.mxu0 %v972
    %1326 = vmatprep.subr.bf16.mxu0 %v969
    %1327 = vmatpush2.bf16.msra.mxu0 %v968
    %1328 = vmatprep.subr.bf16.mxu0 %v965
    %1329 = vmatpush2.bf16.msra.mxu0 %v964
    %1330 = vmatprep.subr.bf16.mxu0 %v961
    %1331 = vmatpush2.bf16.msra.mxu0 %v960
    %1332 = vmatprep.subr.bf16.mxu0 %v957
    %1333 = vmatpush2.bf16.msra.mxu0 %v956
    %1334 = vmatprep.subr.bf16.mxu0 %v953
    %1335 = vmatpush2.bf16.msra.mxu0 %v952
    %1336 = vmatprep.mubr.bf16.mxu0 %v333
    %1337 = vmatmul.mubr.bf16.gmra.mxu0 %v332
    %v1338 = vpop.f32.mrf.mxu0
    %v1339 = vadd.f32 %v297, %v1338
    %v1340 = vpop.f32.mrf.mxu0
    %v1341 = vadd.f32 %v301, %v1340
    %v1342 = vpop.f32.mrf.mxu0
    %v1343 = vadd.f32 %v297, %v1342
    %v1344 = vpop.f32.mrf.mxu0
    %v1345 = vadd.f32 %v301, %v1344
    %1346 = vdwg.mxu0
    %1347 = vmatprep.subr.bf16.mxu0 %v1013
    %1348 = vmatpush1.bf16.msra.mxu0 %v1012
    %1349 = vmatprep.subr.bf16.mxu0 %v1009
    %1350 = vmatpush1.bf16.msra.mxu0 %v1008
    %1351 = vmatprep.subr.bf16.mxu0 %v1005
    %1352 = vmatpush1.bf16.msra.mxu0 %v1004
    %1353 = vmatprep.subr.bf16.mxu0 %v1001
    %1354 = vmatpush1.bf16.msra.mxu0 %v1000
    %1355 = vmatprep.subr.bf16.mxu0 %v997
    %1356 = vmatpush1.bf16.msra.mxu0 %v996
    %1357 = vmatprep.subr.bf16.mxu0 %v993
    %1358 = vmatpush1.bf16.msra.mxu0 %v992
    %1359 = vmatprep.subr.bf16.mxu0 %v989
    %1360 = vmatpush1.bf16.msra.mxu0 %v988
    %1361 = vmatprep.subr.bf16.mxu0 %v985
    %1362 = vmatpush1.bf16.msra.mxu0 %v984
    %1363 = vmatprep.subr.bf16.mxu0 %v1045
    %1364 = vmatpush2.bf16.msra.mxu0 %v1044
    %1365 = vmatprep.subr.bf16.mxu0 %v1041
    %1366 = vmatpush2.bf16.msra.mxu0 %v1040
    %1367 = vmatprep.subr.bf16.mxu0 %v1037
    %1368 = vmatpush2.bf16.msra.mxu0 %v1036
    %1369 = vmatprep.subr.bf16.mxu0 %v1033
    %1370 = vmatpush2.bf16.msra.mxu0 %v1032
    %1371 = vmatprep.subr.bf16.mxu0 %v1029
    %1372 = vmatpush2.bf16.msra.mxu0 %v1028
    %1373 = vmatprep.subr.bf16.mxu0 %v1025
    %1374 = vmatpush2.bf16.msra.mxu0 %v1024
    %1375 = vmatprep.subr.bf16.mxu0 %v1021
    %1376 = vmatpush2.bf16.msra.mxu0 %v1020
    %1377 = vmatprep.subr.bf16.mxu0 %v1017
    %1378 = vmatpush2.bf16.msra.mxu0 %v1016
    %1379 = vmatprep.mubr.bf16.mxu0 %v335
    %1380 = vmatmul.mubr.bf16.gmra.mxu0 %v334
    %v1381 = vpop.f32.mrf.mxu0
    %v1382 = vadd.f32 %v1339, %v1381
    %v1383 = vpop.f32.mrf.mxu0
    %v1384 = vadd.f32 %v1341, %v1383
    %v1385 = vpop.f32.mrf.mxu0
    %v1386 = vadd.f32 %v1343, %v1385
    %v1387 = vpop.f32.mrf.mxu0
    %v1388 = vadd.f32 %v1345, %v1387
    %1389 = vdwg.mxu0
    %1390 = vmatprep.subr.bf16.mxu0 %v1077
    %1391 = vmatpush1.bf16.msra.mxu0 %v1076
    %1392 = vmatprep.subr.bf16.mxu0 %v1073
    %1393 = vmatpush1.bf16.msra.mxu0 %v1072
    %1394 = vmatprep.subr.bf16.mxu0 %v1069
    %1395 = vmatpush1.bf16.msra.mxu0 %v1068
    %1396 = vmatprep.subr.bf16.mxu0 %v1065
    %1397 = vmatpush1.bf16.msra.mxu0 %v1064
    %1398 = vmatprep.subr.bf16.mxu0 %v1061
    %1399 = vmatpush1.bf16.msra.mxu0 %v1060
    %1400 = vmatprep.subr.bf16.mxu0 %v1057
    %1401 = vmatpush1.bf16.msra.mxu0 %v1056
    %1402 = vmatprep.subr.bf16.mxu0 %v1053
    %1403 = vmatpush1.bf16.msra.mxu0 %v1052
    %1404 = vmatprep.subr.bf16.mxu0 %v1049
    %1405 = vmatpush1.bf16.msra.mxu0 %v1048
    %1406 = vmatprep.subr.bf16.mxu0 %v1109
    %1407 = vmatpush2.bf16.msra.mxu0 %v1108
    %1408 = vmatprep.subr.bf16.mxu0 %v1105
    %1409 = vmatpush2.bf16.msra.mxu0 %v1104
    %1410 = vmatprep.subr.bf16.mxu0 %v1101
    %1411 = vmatpush2.bf16.msra.mxu0 %v1100
    %1412 = vmatprep.subr.bf16.mxu0 %v1097
    %1413 = vmatpush2.bf16.msra.mxu0 %v1096
    %1414 = vmatprep.subr.bf16.mxu0 %v1093
    %1415 = vmatpush2.bf16.msra.mxu0 %v1092
    %1416 = vmatprep.subr.bf16.mxu0 %v1089
    %1417 = vmatpush2.bf16.msra.mxu0 %v1088
    %1418 = vmatprep.subr.bf16.mxu0 %v1085
    %1419 = vmatpush2.bf16.msra.mxu0 %v1084
    %1420 = vmatprep.subr.bf16.mxu0 %v1081
    %1421 = vmatpush2.bf16.msra.mxu0 %v1080
    %1422 = vmatprep.mubr.bf16.mxu0 %v337
    %1423 = vmatmul.mubr.bf16.gmra.mxu0 %v336
    %v1424 = vpop.f32.mrf.mxu0
    %v1425 = vadd.f32 %v1382, %v1424
    %v1426 = vpop.f32.mrf.mxu0
    %v1427 = vadd.f32 %v1384, %v1426
    %v1428 = vpop.f32.mrf.mxu0
    %v1429 = vadd.f32 %v1386, %v1428
    %v1430 = vpop.f32.mrf.mxu0
    %v1431 = vadd.f32 %v1388, %v1430
    %1432 = vdwg.mxu0
    %1433 = vmatprep.subr.bf16.mxu0 %v951
    %1434 = vmatpush1.bf16.msra.mxu0 %v950
    %1435 = vmatprep.subr.bf16.mxu0 %v947
    %1436 = vmatpush1.bf16.msra.mxu0 %v946
    %1437 = vmatprep.subr.bf16.mxu0 %v943
    %1438 = vmatpush1.bf16.msra.mxu0 %v942
    %1439 = vmatprep.subr.bf16.mxu0 %v939
    %1440 = vmatpush1.bf16.msra.mxu0 %v938
    %1441 = vmatprep.subr.bf16.mxu0 %v935
    %1442 = vmatpush1.bf16.msra.mxu0 %v934
    %1443 = vmatprep.subr.bf16.mxu0 %v931
    %1444 = vmatpush1.bf16.msra.mxu0 %v930
    %1445 = vmatprep.subr.bf16.mxu0 %v927
    %1446 = vmatpush1.bf16.msra.mxu0 %v926
    %1447 = vmatprep.subr.bf16.mxu0 %v923
    %1448 = vmatpush1.bf16.msra.mxu0 %v922
    %1449 = vmatprep.subr.bf16.mxu0 %v983
    %1450 = vmatpush2.bf16.msra.mxu0 %v982
    %1451 = vmatprep.subr.bf16.mxu0 %v979
    %1452 = vmatpush2.bf16.msra.mxu0 %v978
    %1453 = vmatprep.subr.bf16.mxu0 %v975
    %1454 = vmatpush2.bf16.msra.mxu0 %v974
    %1455 = vmatprep.subr.bf16.mxu0 %v971
    %1456 = vmatpush2.bf16.msra.mxu0 %v970
    %1457 = vmatprep.subr.bf16.mxu0 %v967
    %1458 = vmatpush2.bf16.msra.mxu0 %v966
    %1459 = vmatprep.subr.bf16.mxu0 %v963
    %1460 = vmatpush2.bf16.msra.mxu0 %v962
    %1461 = vmatprep.subr.bf16.mxu0 %v959
    %1462 = vmatpush2.bf16.msra.mxu0 %v958
    %1463 = vmatprep.subr.bf16.mxu0 %v955
    %1464 = vmatpush2.bf16.msra.mxu0 %v954
    %1465 = vmatprep.mubr.bf16.mxu0 %v333
    %1466 = vmatmul.mubr.bf16.gmra.mxu0 %v332
    %v1467 = vpop.f32.mrf.mxu0
    %v1468 = vadd.f32 %v305, %v1467
    %v1469 = vpop.f32.mrf.mxu0
    %v1470 = vadd.f32 %v309, %v1469
    %v1471 = vpop.f32.mrf.mxu0
    %v1472 = vadd.f32 %v305, %v1471
    %v1473 = vpop.f32.mrf.mxu0
    %v1474 = vadd.f32 %v309, %v1473
    %1475 = vdwg.mxu0
    %1476 = vmatprep.subr.bf16.mxu0 %v1015
    %1477 = vmatpush1.bf16.msra.mxu0 %v1014
    %1478 = vmatprep.subr.bf16.mxu0 %v1011
    %1479 = vmatpush1.bf16.msra.mxu0 %v1010
    %1480 = vmatprep.subr.bf16.mxu0 %v1007
    %1481 = vmatpush1.bf16.msra.mxu0 %v1006
    %1482 = vmatprep.subr.bf16.mxu0 %v1003
    %1483 = vmatpush1.bf16.msra.mxu0 %v1002
    %1484 = vmatprep.subr.bf16.mxu0 %v999
    %1485 = vmatpush1.bf16.msra.mxu0 %v998
    %1486 = vmatprep.subr.bf16.mxu0 %v995
    %1487 = vmatpush1.bf16.msra.mxu0 %v994
    %1488 = vmatprep.subr.bf16.mxu0 %v991
    %1489 = vmatpush1.bf16.msra.mxu0 %v990
    %1490 = vmatprep.subr.bf16.mxu0 %v987
    %1491 = vmatpush1.bf16.msra.mxu0 %v986
    %1492 = vmatprep.subr.bf16.mxu0 %v1047
    %1493 = vmatpush2.bf16.msra.mxu0 %v1046
    %1494 = vmatprep.subr.bf16.mxu0 %v1043
    %1495 = vmatpush2.bf16.msra.mxu0 %v1042
    %1496 = vmatprep.subr.bf16.mxu0 %v1039
    %1497 = vmatpush2.bf16.msra.mxu0 %v1038
    %1498 = vmatprep.subr.bf16.mxu0 %v1035
    %1499 = vmatpush2.bf16.msra.mxu0 %v1034
    %1500 = vmatprep.subr.bf16.mxu0 %v1031
    %1501 = vmatpush2.bf16.msra.mxu0 %v1030
    %1502 = vmatprep.subr.bf16.mxu0 %v1027
    %1503 = vmatpush2.bf16.msra.mxu0 %v1026
    %1504 = vmatprep.subr.bf16.mxu0 %v1023
    %1505 = vmatpush2.bf16.msra.mxu0 %v1022
    %1506 = vmatprep.subr.bf16.mxu0 %v1019
    %1507 = vmatpush2.bf16.msra.mxu0 %v1018
    %1508 = vmatprep.mubr.bf16.mxu0 %v335
    %1509 = vmatmul.mubr.bf16.gmra.mxu0 %v334
    %v1510 = vpop.f32.mrf.mxu0
    %v1511 = vadd.f32 %v1468, %v1510
    %v1512 = vpop.f32.mrf.mxu0
    %v1513 = vadd.f32 %v1470, %v1512
    %v1514 = vpop.f32.mrf.mxu0
    %v1515 = vadd.f32 %v1472, %v1514
    %v1516 = vpop.f32.mrf.mxu0
    %v1517 = vadd.f32 %v1474, %v1516
    %1518 = vdwg.mxu0
    %1519 = vmatprep.subr.bf16.mxu0 %v1079
    %1520 = vmatpush1.bf16.msra.mxu0 %v1078
    %1521 = vmatprep.subr.bf16.mxu0 %v1075
    %1522 = vmatpush1.bf16.msra.mxu0 %v1074
    %1523 = vmatprep.subr.bf16.mxu0 %v1071
    %1524 = vmatpush1.bf16.msra.mxu0 %v1070
    %1525 = vmatprep.subr.bf16.mxu0 %v1067
    %1526 = vmatpush1.bf16.msra.mxu0 %v1066
    %1527 = vmatprep.subr.bf16.mxu0 %v1063
    %1528 = vmatpush1.bf16.msra.mxu0 %v1062
    %1529 = vmatprep.subr.bf16.mxu0 %v1059
    %1530 = vmatpush1.bf16.msra.mxu0 %v1058
    %1531 = vmatprep.subr.bf16.mxu0 %v1055
    %1532 = vmatpush1.bf16.msra.mxu0 %v1054
    %1533 = vmatprep.subr.bf16.mxu0 %v1051
    %1534 = vmatpush1.bf16.msra.mxu0 %v1050
    %1535 = vmatprep.subr.bf16.mxu0 %v1111
    %1536 = vmatpush2.bf16.msra.mxu0 %v1110
    %1537 = vmatprep.subr.bf16.mxu0 %v1107
    %1538 = vmatpush2.bf16.msra.mxu0 %v1106
    %1539 = vmatprep.subr.bf16.mxu0 %v1103
    %1540 = vmatpush2.bf16.msra.mxu0 %v1102
    %1541 = vmatprep.subr.bf16.mxu0 %v1099
    %1542 = vmatpush2.bf16.msra.mxu0 %v1098
    %1543 = vmatprep.subr.bf16.mxu0 %v1095
    %1544 = vmatpush2.bf16.msra.mxu0 %v1094
    %1545 = vmatprep.subr.bf16.mxu0 %v1091
    %1546 = vmatpush2.bf16.msra.mxu0 %v1090
    %1547 = vmatprep.subr.bf16.mxu0 %v1087
    %1548 = vmatpush2.bf16.msra.mxu0 %v1086
    %1549 = vmatprep.subr.bf16.mxu0 %v1083
    %1550 = vmatpush2.bf16.msra.mxu0 %v1082
    %1551 = vmatprep.mubr.bf16.mxu0 %v337
    %1552 = vmatmul.mubr.bf16.gmra.mxu0 %v336
    %v1553 = vpop.f32.mrf.mxu0
    %v1554 = vadd.f32 %v1511, %v1553
    %v1555 = vpop.f32.mrf.mxu0
    %v1556 = vadd.f32 %v1513, %v1555
    %v1557 = vpop.f32.mrf.mxu0
    %v1558 = vadd.f32 %v1515, %v1557
    %v1559 = vpop.f32.mrf.mxu0
    %v1560 = vadd.f32 %v1517, %v1559
    %1561 = vdwg.mxu0
    %v1562 = vmax.f32 %v1425, 0.0
    %v1563 = vmax.f32 %v1427, 0.0
    %v1564 = vmax.f32 %v1554, 0.0
    %v1565 = vmax.f32 %v1556, 0.0
    %v1566 = vmax.f32 %v1429, 0.0
    %v1567 = vmax.f32 %v1431, 0.0
    %v1568 = vmax.f32 %v1558, 0.0
    %v1569 = vmax.f32 %v1560, 0.0
    %v1570 = vpack.c.bf16 %v1566, %v1562
    %v1571 = vpack.c.bf16 %v1567, %v1563
    %v1572 = vpack.c.bf16 %v1568, %v1564
    %v1573 = vpack.c.bf16 %v1569, %v1565
    %v1574 = vld [vmem:[#allocation8] sm:$0xff]
    %v1575 = vld [vmem:[#allocation8 + $0x8] sm:$0xff]
    %v1576 = vld [vmem:[#allocation8 + $0x10] sm:$0xff]
    %v1577 = vld [vmem:[#allocation8 + $0x18] sm:$0xff]
    %v1578 = vld [vmem:[#allocation8 + $0x20] sm:$0xff]
    %v1579 = vld [vmem:[#allocation8 + $0x28] sm:$0xff]
    %v1580 = vld [vmem:[#allocation8 + $0x30] sm:$0xff]
    %v1581 = vld [vmem:[#allocation8 + $0x38] sm:$0xff]
    %v1582 = vld [vmem:[#allocation8 + $0x40] sm:$0xff]
    %v1583 = vld [vmem:[#allocation8 + $0x48] sm:$0xff]
    %v1584 = vld [vmem:[#allocation8 + $0x50] sm:$0xff]
    %v1585 = vld [vmem:[#allocation8 + $0x58] sm:$0xff]
    %v1586 = vld [vmem:[#allocation8 + $0x60] sm:$0xff]
    %v1587 = vld [vmem:[#allocation8 + $0x68] sm:$0xff]
    %v1588 = vld [vmem:[#allocation8 + $0x70] sm:$0xff]
    %v1589 = vld [vmem:[#allocation8 + $0x78] sm:$0xff]
    %v1590 = vld [vmem:[#allocation8 + $0x80] sm:$0xff]
    %v1591 = vld [vmem:[#allocation8 + $0x88] sm:$0xff]
    %v1592 = vld [vmem:[#allocation8 + $0x90] sm:$0xff]
    %v1593 = vld [vmem:[#allocation8 + $0x98] sm:$0xff]
    %v1594 = vld [vmem:[#allocation8 + $0xa0] sm:$0xff]
    %v1595 = vld [vmem:[#allocation8 + $0xa8] sm:$0xff]
    %v1596 = vld [vmem:[#allocation8 + $0xb0] sm:$0xff]
    %v1597 = vld [vmem:[#allocation8 + $0xb8] sm:$0xff]
    %v1598 = vld [vmem:[#allocation8 + $0xc0] sm:$0xff]
    %v1599 = vld [vmem:[#allocation8 + $0xc8] sm:$0xff]
    %v1600 = vld [vmem:[#allocation8 + $0xd0] sm:$0xff]
    %v1601 = vld [vmem:[#allocation8 + $0xd8] sm:$0xff]
    %v1602 = vld [vmem:[#allocation8 + $0xe0] sm:$0xff]
    %v1603 = vld [vmem:[#allocation8 + $0xe8] sm:$0xff]
    %v1604 = vld [vmem:[#allocation8 + $0xf0] sm:$0xff]
    %v1605 = vld [vmem:[#allocation8 + $0xf8] sm:$0xff]
    %v1606 = vld [vmem:[#allocation8 + $0x100] sm:$0xff]
    %v1607 = vld [vmem:[#allocation8 + $0x108] sm:$0xff]
    %v1608 = vld [vmem:[#allocation8 + $0x110] sm:$0xff]
    %v1609 = vld [vmem:[#allocation8 + $0x118] sm:$0xff]
    %v1610 = vld [vmem:[#allocation8 + $0x120] sm:$0xff]
    %v1611 = vld [vmem:[#allocation8 + $0x128] sm:$0xff]
    %v1612 = vld [vmem:[#allocation8 + $0x130] sm:$0xff]
    %v1613 = vld [vmem:[#allocation8 + $0x138] sm:$0xff]
    %v1614 = vld [vmem:[#allocation8 + $0x140] sm:$0xff]
    %v1615 = vld [vmem:[#allocation8 + $0x148] sm:$0xff]
    %v1616 = vld [vmem:[#allocation8 + $0x150] sm:$0xff]
    %v1617 = vld [vmem:[#allocation8 + $0x158] sm:$0xff]
    %v1618 = vld [vmem:[#allocation8 + $0x160] sm:$0xff]
    %v1619 = vld [vmem:[#allocation8 + $0x168] sm:$0xff]
    %v1620 = vld [vmem:[#allocation8 + $0x170] sm:$0xff]
    %v1621 = vld [vmem:[#allocation8 + $0x178] sm:$0xff]
    %v1622 = vld [vmem:[#allocation8 + $0x180] sm:$0xff]
    %v1623 = vld [vmem:[#allocation8 + $0x188] sm:$0xff]
    %v1624 = vld [vmem:[#allocation8 + $0x190] sm:$0xff]
    %v1625 = vld [vmem:[#allocation8 + $0x198] sm:$0xff]
    %v1626 = vld [vmem:[#allocation8 + $0x1a0] sm:$0xff]
    %v1627 = vld [vmem:[#allocation8 + $0x1a8] sm:$0xff]
    %v1628 = vld [vmem:[#allocation8 + $0x1b0] sm:$0xff]
    %v1629 = vld [vmem:[#allocation8 + $0x1b8] sm:$0xff]
    %v1630 = vld [vmem:[#allocation8 + $0x1c0] sm:$0xff]
    %v1631 = vld [vmem:[#allocation8 + $0x1c8] sm:$0xff]
    %v1632 = vld [vmem:[#allocation8 + $0x1d0] sm:$0xff]
    %v1633 = vld [vmem:[#allocation8 + $0x1d8] sm:$0xff]
    %v1634 = vld [vmem:[#allocation8 + $0x1e0] sm:$0xff]
    %v1635 = vld [vmem:[#allocation8 + $0x1e8] sm:$0xff]
    %v1636 = vld [vmem:[#allocation8 + $0x1f0] sm:$0xff]
    %v1637 = vld [vmem:[#allocation8 + $0x1f8] sm:$0xff]
    %v1638 = vld [vmem:[#allocation8 + $0x200] sm:$0xff]
    %v1639 = vld [vmem:[#allocation8 + $0x208] sm:$0xff]
    %v1640 = vld [vmem:[#allocation8 + $0x210] sm:$0xff]
    %v1641 = vld [vmem:[#allocation8 + $0x218] sm:$0xff]
    %v1642 = vld [vmem:[#allocation8 + $0x220] sm:$0xff]
    %v1643 = vld [vmem:[#allocation8 + $0x228] sm:$0xff]
    %v1644 = vld [vmem:[#allocation8 + $0x230] sm:$0xff]
    %v1645 = vld [vmem:[#allocation8 + $0x238] sm:$0xff]
    %v1646 = vld [vmem:[#allocation8 + $0x240] sm:$0xff]
    %v1647 = vld [vmem:[#allocation8 + $0x248] sm:$0xff]
    %v1648 = vld [vmem:[#allocation8 + $0x250] sm:$0xff]
    %v1649 = vld [vmem:[#allocation8 + $0x258] sm:$0xff]
    %v1650 = vld [vmem:[#allocation8 + $0x260] sm:$0xff]
    %v1651 = vld [vmem:[#allocation8 + $0x268] sm:$0xff]
    %v1652 = vld [vmem:[#allocation8 + $0x270] sm:$0xff]
    %v1653 = vld [vmem:[#allocation8 + $0x278] sm:$0xff]
    %v1654 = vld [vmem:[#allocation8 + $0x280] sm:$0xff]
    %v1655 = vld [vmem:[#allocation8 + $0x288] sm:$0xff]
    %v1656 = vld [vmem:[#allocation8 + $0x290] sm:$0xff]
    %v1657 = vld [vmem:[#allocation8 + $0x298] sm:$0xff]
    %v1658 = vld [vmem:[#allocation8 + $0x2a0] sm:$0xff]
    %v1659 = vld [vmem:[#allocation8 + $0x2a8] sm:$0xff]
    %v1660 = vld [vmem:[#allocation8 + $0x2b0] sm:$0xff]
    %v1661 = vld [vmem:[#allocation8 + $0x2b8] sm:$0xff]
    %v1662 = vld [vmem:[#allocation8 + $0x2c0] sm:$0xff]
    %v1663 = vld [vmem:[#allocation8 + $0x2c8] sm:$0xff]
    %v1664 = vld [vmem:[#allocation8 + $0x2d0] sm:$0xff]
    %v1665 = vld [vmem:[#allocation8 + $0x2d8] sm:$0xff]
    %v1666 = vld [vmem:[#allocation8 + $0x2e0] sm:$0xff]
    %v1667 = vld [vmem:[#allocation8 + $0x2e8] sm:$0xff]
    %v1668 = vld [vmem:[#allocation8 + $0x2f0] sm:$0xff]
    %v1669 = vld [vmem:[#allocation8 + $0x2f8] sm:$0xff]
    %v1670 = vld [vmem:[#allocation8 + $0x300] sm:$0xff]
    %v1671 = vld [vmem:[#allocation8 + $0x308] sm:$0xff]
    %v1672 = vld [vmem:[#allocation8 + $0x310] sm:$0xff]
    %v1673 = vld [vmem:[#allocation8 + $0x318] sm:$0xff]
    %v1674 = vld [vmem:[#allocation8 + $0x320] sm:$0xff]
    %v1675 = vld [vmem:[#allocation8 + $0x328] sm:$0xff]
    %v1676 = vld [vmem:[#allocation8 + $0x330] sm:$0xff]
    %v1677 = vld [vmem:[#allocation8 + $0x338] sm:$0xff]
    %v1678 = vld [vmem:[#allocation8 + $0x340] sm:$0xff]
    %v1679 = vld [vmem:[#allocation8 + $0x348] sm:$0xff]
    %v1680 = vld [vmem:[#allocation8 + $0x350] sm:$0xff]
    %v1681 = vld [vmem:[#allocation8 + $0x358] sm:$0xff]
    %v1682 = vld [vmem:[#allocation8 + $0x360] sm:$0xff]
    %v1683 = vld [vmem:[#allocation8 + $0x368] sm:$0xff]
    %v1684 = vld [vmem:[#allocation8 + $0x370] sm:$0xff]
    %v1685 = vld [vmem:[#allocation8 + $0x378] sm:$0xff]
    %v1686 = vld [vmem:[#allocation8 + $0x380] sm:$0xff]
    %v1687 = vld [vmem:[#allocation8 + $0x388] sm:$0xff]
    %v1688 = vld [vmem:[#allocation8 + $0x390] sm:$0xff]
    %v1689 = vld [vmem:[#allocation8 + $0x398] sm:$0xff]
    %v1690 = vld [vmem:[#allocation8 + $0x3a0] sm:$0xff]
    %v1691 = vld [vmem:[#allocation8 + $0x3a8] sm:$0xff]
    %v1692 = vld [vmem:[#allocation8 + $0x3b0] sm:$0xff]
    %v1693 = vld [vmem:[#allocation8 + $0x3b8] sm:$0xff]
    %v1694 = vld [vmem:[#allocation8 + $0x3c0] sm:$0xff]
    %v1695 = vld [vmem:[#allocation8 + $0x3c8] sm:$0xff]
    %v1696 = vld [vmem:[#allocation8 + $0x3d0] sm:$0xff]
    %v1697 = vld [vmem:[#allocation8 + $0x3d8] sm:$0xff]
    %v1698 = vld [vmem:[#allocation8 + $0x3e0] sm:$0xff]
    %v1699 = vld [vmem:[#allocation8 + $0x3e8] sm:$0xff]
    %v1700 = vld [vmem:[#allocation8 + $0x3f0] sm:$0xff]
    %v1701 = vld [vmem:[#allocation8 + $0x3f8] sm:$0xff]
    %v1702 = vld [vmem:[%s4] sm:$0xf]
    %v1704 = vlaneseq
    %v1705 = vshrl.u32 %v1704, 7
    %v1706 = vsub.s32 0, %v1705
    %v1707 = vrot.slane %v1702, %v1706
    %v1708 = vlaneseq
    %v1709 = vshrl.u32 %v1708, 7
    %v1710 = vsub.s32 1, %v1709
    %v1711 = vrot.slane %v1702, %v1710
    %v1712 = vlaneseq
    %v1713 = vshrl.u32 %v1712, 7
    %v1714 = vsub.s32 2, %v1713
    %v1715 = vrot.slane %v1702, %v1714
    %v1716 = vlaneseq
    %v1717 = vshrl.u32 %v1716, 7
    %v1718 = vsub.s32 3, %v1717
    %v1719 = vrot.slane %v1702, %v1718
    %v1852 = vunpack.c.l.b16 %v1574
    %v1853 = vunpack.c.h.b16 %v1574
    %v1854 = vunpack.c.l.b16 %v1575
    %v1855 = vunpack.c.h.b16 %v1575
    %v1856 = vunpack.c.l.b16 %v1576
    %v1857 = vunpack.c.h.b16 %v1576
    %v1858 = vunpack.c.l.b16 %v1577
    %v1859 = vunpack.c.h.b16 %v1577
    %v1860 = vunpack.c.l.b16 %v1578
    %v1861 = vunpack.c.h.b16 %v1578
    %v1862 = vunpack.c.l.b16 %v1579
    %v1863 = vunpack.c.h.b16 %v1579
    %v1864 = vunpack.c.l.b16 %v1580
    %v1865 = vunpack.c.h.b16 %v1580
    %v1866 = vunpack.c.l.b16 %v1581
    %v1867 = vunpack.c.h.b16 %v1581
    %v1868 = vunpack.c.l.b16 %v1582
    %v1869 = vunpack.c.h.b16 %v1582
    %v1870 = vunpack.c.l.b16 %v1583
    %v1871 = vunpack.c.h.b16 %v1583
    %v1872 = vunpack.c.l.b16 %v1584
    %v1873 = vunpack.c.h.b16 %v1584
    %v1874 = vunpack.c.l.b16 %v1585
    %v1875 = vunpack.c.h.b16 %v1585
    %v1876 = vunpack.c.l.b16 %v1586
    %v1877 = vunpack.c.h.b16 %v1586
    %v1878 = vunpack.c.l.b16 %v1587
    %v1879 = vunpack.c.h.b16 %v1587
    %v1880 = vunpack.c.l.b16 %v1588
    %v1881 = vunpack.c.h.b16 %v1588
    %v1882 = vunpack.c.l.b16 %v1589
    %v1883 = vunpack.c.h.b16 %v1589
    %v1884 = vunpack.c.l.b16 %v1590
    %v1885 = vunpack.c.h.b16 %v1590
    %v1886 = vunpack.c.l.b16 %v1591
    %v1887 = vunpack.c.h.b16 %v1591
    %v1888 = vunpack.c.l.b16 %v1592
    %v1889 = vunpack.c.h.b16 %v1592
    %v1890 = vunpack.c.l.b16 %v1593
    %v1891 = vunpack.c.h.b16 %v1593
    %v1892 = vunpack.c.l.b16 %v1594
    %v1893 = vunpack.c.h.b16 %v1594
    %v1894 = vunpack.c.l.b16 %v1595
    %v1895 = vunpack.c.h.b16 %v1595
    %v1896 = vunpack.c.l.b16 %v1596
    %v1897 = vunpack.c.h.b16 %v1596
    %v1898 = vunpack.c.l.b16 %v1597
    %v1899 = vunpack.c.h.b16 %v1597
    %v1900 = vunpack.c.l.b16 %v1598
    %v1901 = vunpack.c.h.b16 %v1598
    %v1902 = vunpack.c.l.b16 %v1599
    %v1903 = vunpack.c.h.b16 %v1599
    %v1904 = vunpack.c.l.b16 %v1600
    %v1905 = vunpack.c.h.b16 %v1600
    %v1906 = vunpack.c.l.b16 %v1601
    %v1907 = vunpack.c.h.b16 %v1601
    %v1908 = vunpack.c.l.b16 %v1602
    %v1909 = vunpack.c.h.b16 %v1602
    %v1910 = vunpack.c.l.b16 %v1603
    %v1911 = vunpack.c.h.b16 %v1603
    %v1912 = vunpack.c.l.b16 %v1604
    %v1913 = vunpack.c.h.b16 %v1604
    %v1914 = vunpack.c.l.b16 %v1605
    %v1915 = vunpack.c.h.b16 %v1605
    %v1916 = vunpack.c.l.b16 %v1606
    %v1917 = vunpack.c.h.b16 %v1606
    %v1918 = vunpack.c.l.b16 %v1607
    %v1919 = vunpack.c.h.b16 %v1607
    %v1920 = vunpack.c.l.b16 %v1608
    %v1921 = vunpack.c.h.b16 %v1608
    %v1922 = vunpack.c.l.b16 %v1609
    %v1923 = vunpack.c.h.b16 %v1609
    %v1924 = vunpack.c.l.b16 %v1610
    %v1925 = vunpack.c.h.b16 %v1610
    %v1926 = vunpack.c.l.b16 %v1611
    %v1927 = vunpack.c.h.b16 %v1611
    %v1928 = vunpack.c.l.b16 %v1612
    %v1929 = vunpack.c.h.b16 %v1612
    %v1930 = vunpack.c.l.b16 %v1613
    %v1931 = vunpack.c.h.b16 %v1613
    %v1932 = vunpack.c.l.b16 %v1614
    %v1933 = vunpack.c.h.b16 %v1614
    %v1934 = vunpack.c.l.b16 %v1615
    %v1935 = vunpack.c.h.b16 %v1615
    %v1936 = vunpack.c.l.b16 %v1616
    %v1937 = vunpack.c.h.b16 %v1616
    %v1938 = vunpack.c.l.b16 %v1617
    %v1939 = vunpack.c.h.b16 %v1617
    %v1940 = vunpack.c.l.b16 %v1618
    %v1941 = vunpack.c.h.b16 %v1618
    %v1942 = vunpack.c.l.b16 %v1619
    %v1943 = vunpack.c.h.b16 %v1619
    %v1944 = vunpack.c.l.b16 %v1620
    %v1945 = vunpack.c.h.b16 %v1620
    %v1946 = vunpack.c.l.b16 %v1621
    %v1947 = vunpack.c.h.b16 %v1621
    %v1948 = vunpack.c.l.b16 %v1622
    %v1949 = vunpack.c.h.b16 %v1622
    %v1950 = vunpack.c.l.b16 %v1623
    %v1951 = vunpack.c.h.b16 %v1623
    %v1952 = vunpack.c.l.b16 %v1624
    %v1953 = vunpack.c.h.b16 %v1624
    %v1954 = vunpack.c.l.b16 %v1625
    %v1955 = vunpack.c.h.b16 %v1625
    %v1956 = vunpack.c.l.b16 %v1626
    %v1957 = vunpack.c.h.b16 %v1626
    %v1958 = vunpack.c.l.b16 %v1627
    %v1959 = vunpack.c.h.b16 %v1627
    %v1960 = vunpack.c.l.b16 %v1628
    %v1961 = vunpack.c.h.b16 %v1628
    %v1962 = vunpack.c.l.b16 %v1629
    %v1963 = vunpack.c.h.b16 %v1629
    %v1964 = vunpack.c.l.b16 %v1630
    %v1965 = vunpack.c.h.b16 %v1630
    %v1966 = vunpack.c.l.b16 %v1631
    %v1967 = vunpack.c.h.b16 %v1631
    %v1968 = vunpack.c.l.b16 %v1632
    %v1969 = vunpack.c.h.b16 %v1632
    %v1970 = vunpack.c.l.b16 %v1633
    %v1971 = vunpack.c.h.b16 %v1633
    %v1972 = vunpack.c.l.b16 %v1634
    %v1973 = vunpack.c.h.b16 %v1634
    %v1974 = vunpack.c.l.b16 %v1635
    %v1975 = vunpack.c.h.b16 %v1635
    %v1976 = vunpack.c.l.b16 %v1636
    %v1977 = vunpack.c.h.b16 %v1636
    %v1978 = vunpack.c.l.b16 %v1637
    %v1979 = vunpack.c.h.b16 %v1637
    %v1980 = vunpack.c.l.b16 %v1638
    %v1981 = vunpack.c.h.b16 %v1638
    %v1982 = vunpack.c.l.b16 %v1639
    %v1983 = vunpack.c.h.b16 %v1639
    %v1984 = vunpack.c.l.b16 %v1640
    %v1985 = vunpack.c.h.b16 %v1640
    %v1986 = vunpack.c.l.b16 %v1641
    %v1987 = vunpack.c.h.b16 %v1641
    %v1988 = vunpack.c.l.b16 %v1642
    %v1989 = vunpack.c.h.b16 %v1642
    %v1990 = vunpack.c.l.b16 %v1643
    %v1991 = vunpack.c.h.b16 %v1643
    %v1992 = vunpack.c.l.b16 %v1644
    %v1993 = vunpack.c.h.b16 %v1644
    %v1994 = vunpack.c.l.b16 %v1645
    %v1995 = vunpack.c.h.b16 %v1645
    %v1996 = vunpack.c.l.b16 %v1646
    %v1997 = vunpack.c.h.b16 %v1646
    %v1998 = vunpack.c.l.b16 %v1647
    %v1999 = vunpack.c.h.b16 %v1647
    %v2000 = vunpack.c.l.b16 %v1648
    %v2001 = vunpack.c.h.b16 %v1648
    %v2002 = vunpack.c.l.b16 %v1649
    %v2003 = vunpack.c.h.b16 %v1649
    %v2004 = vunpack.c.l.b16 %v1650
    %v2005 = vunpack.c.h.b16 %v1650
    %v2006 = vunpack.c.l.b16 %v1651
    %v2007 = vunpack.c.h.b16 %v1651
    %v2008 = vunpack.c.l.b16 %v1652
    %v2009 = vunpack.c.h.b16 %v1652
    %v2010 = vunpack.c.l.b16 %v1653
    %v2011 = vunpack.c.h.b16 %v1653
    %v2012 = vunpack.c.l.b16 %v1654
    %v2013 = vunpack.c.h.b16 %v1654
    %v2014 = vunpack.c.l.b16 %v1655
    %v2015 = vunpack.c.h.b16 %v1655
    %v2016 = vunpack.c.l.b16 %v1656
    %v2017 = vunpack.c.h.b16 %v1656
    %v2018 = vunpack.c.l.b16 %v1657
    %v2019 = vunpack.c.h.b16 %v1657
    %v2020 = vunpack.c.l.b16 %v1658
    %v2021 = vunpack.c.h.b16 %v1658
    %v2022 = vunpack.c.l.b16 %v1659
    %v2023 = vunpack.c.h.b16 %v1659
    %v2024 = vunpack.c.l.b16 %v1660
    %v2025 = vunpack.c.h.b16 %v1660
    %v2026 = vunpack.c.l.b16 %v1661
    %v2027 = vunpack.c.h.b16 %v1661
    %v2028 = vunpack.c.l.b16 %v1662
    %v2029 = vunpack.c.h.b16 %v1662
    %v2030 = vunpack.c.l.b16 %v1663
    %v2031 = vunpack.c.h.b16 %v1663
    %v2032 = vunpack.c.l.b16 %v1664
    %v2033 = vunpack.c.h.b16 %v1664
    %v2034 = vunpack.c.l.b16 %v1665
    %v2035 = vunpack.c.h.b16 %v1665
    %v2036 = vunpack.c.l.b16 %v1666
    %v2037 = vunpack.c.h.b16 %v1666
    %v2038 = vunpack.c.l.b16 %v1667
    %v2039 = vunpack.c.h.b16 %v1667
    %v2040 = vunpack.c.l.b16 %v1668
    %v2041 = vunpack.c.h.b16 %v1668
    %v2042 = vunpack.c.l.b16 %v1669
    %v2043 = vunpack.c.h.b16 %v1669
    %v2044 = vunpack.c.l.b16 %v1670
    %v2045 = vunpack.c.h.b16 %v1670
    %v2046 = vunpack.c.l.b16 %v1671
    %v2047 = vunpack.c.h.b16 %v1671
    %v2048 = vunpack.c.l.b16 %v1672
    %v2049 = vunpack.c.h.b16 %v1672
    %v2050 = vunpack.c.l.b16 %v1673
    %v2051 = vunpack.c.h.b16 %v1673
    %v2052 = vunpack.c.l.b16 %v1674
    %v2053 = vunpack.c.h.b16 %v1674
    %v2054 = vunpack.c.l.b16 %v1675
    %v2055 = vunpack.c.h.b16 %v1675
    %v2056 = vunpack.c.l.b16 %v1676
    %v2057 = vunpack.c.h.b16 %v1676
    %v2058 = vunpack.c.l.b16 %v1677
    %v2059 = vunpack.c.h.b16 %v1677
    %v2060 = vunpack.c.l.b16 %v1678
    %v2061 = vunpack.c.h.b16 %v1678
    %v2062 = vunpack.c.l.b16 %v1679
    %v2063 = vunpack.c.h.b16 %v1679
    %v2064 = vunpack.c.l.b16 %v1680
    %v2065 = vunpack.c.h.b16 %v1680
    %v2066 = vunpack.c.l.b16 %v1681
    %v2067 = vunpack.c.h.b16 %v1681
    %v2068 = vunpack.c.l.b16 %v1682
    %v2069 = vunpack.c.h.b16 %v1682
    %v2070 = vunpack.c.l.b16 %v1683
    %v2071 = vunpack.c.h.b16 %v1683
    %v2072 = vunpack.c.l.b16 %v1684
    %v2073 = vunpack.c.h.b16 %v1684
    %v2074 = vunpack.c.l.b16 %v1685
    %v2075 = vunpack.c.h.b16 %v1685
    %v2076 = vunpack.c.l.b16 %v1686
    %v2077 = vunpack.c.h.b16 %v1686
    %v2078 = vunpack.c.l.b16 %v1687
    %v2079 = vunpack.c.h.b16 %v1687
    %v2080 = vunpack.c.l.b16 %v1688
    %v2081 = vunpack.c.h.b16 %v1688
    %v2082 = vunpack.c.l.b16 %v1689
    %v2083 = vunpack.c.h.b16 %v1689
    %v2084 = vunpack.c.l.b16 %v1690
    %v2085 = vunpack.c.h.b16 %v1690
    %v2086 = vunpack.c.l.b16 %v1691
    %v2087 = vunpack.c.h.b16 %v1691
    %v2088 = vunpack.c.l.b16 %v1692
    %v2089 = vunpack.c.h.b16 %v1692
    %v2090 = vunpack.c.l.b16 %v1693
    %v2091 = vunpack.c.h.b16 %v1693
    %v2092 = vunpack.c.l.b16 %v1694
    %v2093 = vunpack.c.h.b16 %v1694
    %v2094 = vunpack.c.l.b16 %v1695
    %v2095 = vunpack.c.h.b16 %v1695
    %v2096 = vunpack.c.l.b16 %v1696
    %v2097 = vunpack.c.h.b16 %v1696
    %v2098 = vunpack.c.l.b16 %v1697
    %v2099 = vunpack.c.h.b16 %v1697
    %v2100 = vunpack.c.l.b16 %v1698
    %v2101 = vunpack.c.h.b16 %v1698
    %v2102 = vunpack.c.l.b16 %v1699
    %v2103 = vunpack.c.h.b16 %v1699
    %v2104 = vunpack.c.l.b16 %v1700
    %v2105 = vunpack.c.h.b16 %v1700
    %v2106 = vunpack.c.l.b16 %v1701
    %v2107 = vunpack.c.h.b16 %v1701
    %v2108 = vpack.c.b16 %v1856, %v1852
    %v2109 = vpack.c.b16 %v1857, %v1853
    %v2110 = vpack.c.b16 %v1858, %v1854
    %v2111 = vpack.c.b16 %v1859, %v1855
    %v2112 = vpack.c.b16 %v1864, %v1860
    %v2113 = vpack.c.b16 %v1865, %v1861
    %v2114 = vpack.c.b16 %v1866, %v1862
    %v2115 = vpack.c.b16 %v1867, %v1863
    %v2116 = vpack.c.b16 %v1872, %v1868
    %v2117 = vpack.c.b16 %v1873, %v1869
    %v2118 = vpack.c.b16 %v1874, %v1870
    %v2119 = vpack.c.b16 %v1875, %v1871
    %v2120 = vpack.c.b16 %v1880, %v1876
    %v2121 = vpack.c.b16 %v1881, %v1877
    %v2122 = vpack.c.b16 %v1882, %v1878
    %v2123 = vpack.c.b16 %v1883, %v1879
    %v2124 = vpack.c.b16 %v1888, %v1884
    %v2125 = vpack.c.b16 %v1889, %v1885
    %v2126 = vpack.c.b16 %v1890, %v1886
    %v2127 = vpack.c.b16 %v1891, %v1887
    %v2128 = vpack.c.b16 %v1896, %v1892
    %v2129 = vpack.c.b16 %v1897, %v1893
    %v2130 = vpack.c.b16 %v1898, %v1894
    %v2131 = vpack.c.b16 %v1899, %v1895
    %v2132 = vpack.c.b16 %v1904, %v1900
    %v2133 = vpack.c.b16 %v1905, %v1901
    %v2134 = vpack.c.b16 %v1906, %v1902
    %v2135 = vpack.c.b16 %v1907, %v1903
    %v2136 = vpack.c.b16 %v1912, %v1908
    %v2137 = vpack.c.b16 %v1913, %v1909
    %v2138 = vpack.c.b16 %v1914, %v1910
    %v2139 = vpack.c.b16 %v1915, %v1911
    %v2140 = vpack.c.b16 %v1920, %v1916
    %v2141 = vpack.c.b16 %v1921, %v1917
    %v2142 = vpack.c.b16 %v1922, %v1918
    %v2143 = vpack.c.b16 %v1923, %v1919
    %v2144 = vpack.c.b16 %v1928, %v1924
    %v2145 = vpack.c.b16 %v1929, %v1925
    %v2146 = vpack.c.b16 %v1930, %v1926
    %v2147 = vpack.c.b16 %v1931, %v1927
    %v2148 = vpack.c.b16 %v1936, %v1932
    %v2149 = vpack.c.b16 %v1937, %v1933
    %v2150 = vpack.c.b16 %v1938, %v1934
    %v2151 = vpack.c.b16 %v1939, %v1935
    %v2152 = vpack.c.b16 %v1944, %v1940
    %v2153 = vpack.c.b16 %v1945, %v1941
    %v2154 = vpack.c.b16 %v1946, %v1942
    %v2155 = vpack.c.b16 %v1947, %v1943
    %v2156 = vpack.c.b16 %v1952, %v1948
    %v2157 = vpack.c.b16 %v1953, %v1949
    %v2158 = vpack.c.b16 %v1954, %v1950
    %v2159 = vpack.c.b16 %v1955, %v1951
    %v2160 = vpack.c.b16 %v1960, %v1956
    %v2161 = vpack.c.b16 %v1961, %v1957
    %v2162 = vpack.c.b16 %v1962, %v1958
    %v2163 = vpack.c.b16 %v1963, %v1959
    %v2164 = vpack.c.b16 %v1968, %v1964
    %v2165 = vpack.c.b16 %v1969, %v1965
    %v2166 = vpack.c.b16 %v1970, %v1966
    %v2167 = vpack.c.b16 %v1971, %v1967
    %v2168 = vpack.c.b16 %v1976, %v1972
    %v2169 = vpack.c.b16 %v1977, %v1973
    %v2170 = vpack.c.b16 %v1978, %v1974
    %v2171 = vpack.c.b16 %v1979, %v1975
    %v2172 = vpack.c.b16 %v1984, %v1980
    %v2173 = vpack.c.b16 %v1985, %v1981
    %v2174 = vpack.c.b16 %v1986, %v1982
    %v2175 = vpack.c.b16 %v1987, %v1983
    %v2176 = vpack.c.b16 %v1992, %v1988
    %v2177 = vpack.c.b16 %v1993, %v1989
    %v2178 = vpack.c.b16 %v1994, %v1990
    %v2179 = vpack.c.b16 %v1995, %v1991
    %v2180 = vpack.c.b16 %v2000, %v1996
    %v2181 = vpack.c.b16 %v2001, %v1997
    %v2182 = vpack.c.b16 %v2002, %v1998
    %v2183 = vpack.c.b16 %v2003, %v1999
    %v2184 = vpack.c.b16 %v2008, %v2004
    %v2185 = vpack.c.b16 %v2009, %v2005
    %v2186 = vpack.c.b16 %v2010, %v2006
    %v2187 = vpack.c.b16 %v2011, %v2007
    %v2188 = vpack.c.b16 %v2016, %v2012
    %v2189 = vpack.c.b16 %v2017, %v2013
    %v2190 = vpack.c.b16 %v2018, %v2014
    %v2191 = vpack.c.b16 %v2019, %v2015
    %v2192 = vpack.c.b16 %v2024, %v2020
    %v2193 = vpack.c.b16 %v2025, %v2021
    %v2194 = vpack.c.b16 %v2026, %v2022
    %v2195 = vpack.c.b16 %v2027, %v2023
    %v2196 = vpack.c.b16 %v2032, %v2028
    %v2197 = vpack.c.b16 %v2033, %v2029
    %v2198 = vpack.c.b16 %v2034, %v2030
    %v2199 = vpack.c.b16 %v2035, %v2031
    %v2200 = vpack.c.b16 %v2040, %v2036
    %v2201 = vpack.c.b16 %v2041, %v2037
    %v2202 = vpack.c.b16 %v2042, %v2038
    %v2203 = vpack.c.b16 %v2043, %v2039
    %v2204 = vpack.c.b16 %v2048, %v2044
    %v2205 = vpack.c.b16 %v2049, %v2045
    %v2206 = vpack.c.b16 %v2050, %v2046
    %v2207 = vpack.c.b16 %v2051, %v2047
    %v2208 = vpack.c.b16 %v2056, %v2052
    %v2209 = vpack.c.b16 %v2057, %v2053
    %v2210 = vpack.c.b16 %v2058, %v2054
    %v2211 = vpack.c.b16 %v2059, %v2055
    %v2212 = vpack.c.b16 %v2064, %v2060
    %v2213 = vpack.c.b16 %v2065, %v2061
    %v2214 = vpack.c.b16 %v2066, %v2062
    %v2215 = vpack.c.b16 %v2067, %v2063
    %v2216 = vpack.c.b16 %v2072, %v2068
    %v2217 = vpack.c.b16 %v2073, %v2069
    %v2218 = vpack.c.b16 %v2074, %v2070
    %v2219 = vpack.c.b16 %v2075, %v2071
    %v2220 = vpack.c.b16 %v2080, %v2076
    %v2221 = vpack.c.b16 %v2081, %v2077
    %v2222 = vpack.c.b16 %v2082, %v2078
    %v2223 = vpack.c.b16 %v2083, %v2079
    %v2224 = vpack.c.b16 %v2088, %v2084
    %v2225 = vpack.c.b16 %v2089, %v2085
    %v2226 = vpack.c.b16 %v2090, %v2086
    %v2227 = vpack.c.b16 %v2091, %v2087
    %v2228 = vpack.c.b16 %v2096, %v2092
    %v2229 = vpack.c.b16 %v2097, %v2093
    %v2230 = vpack.c.b16 %v2098, %v2094
    %v2231 = vpack.c.b16 %v2099, %v2095
    %v2232 = vpack.c.b16 %v2104, %v2100
    %v2233 = vpack.c.b16 %v2105, %v2101
    %v2234 = vpack.c.b16 %v2106, %v2102
    %v2235 = vpack.c.b16 %v2107, %v2103
    %2364 = vmatprep.subr.bf16.mxu0 %v2137
    %2365 = vmatpush1.bf16.msra.mxu0 %v2136
    %2366 = vmatprep.subr.bf16.mxu0 %v2133
    %2367 = vmatpush1.bf16.msra.mxu0 %v2132
    %2368 = vmatprep.subr.bf16.mxu0 %v2129
    %2369 = vmatpush1.bf16.msra.mxu0 %v2128
    %2370 = vmatprep.subr.bf16.mxu0 %v2125
    %2371 = vmatpush1.bf16.msra.mxu0 %v2124
    %2372 = vmatprep.subr.bf16.mxu0 %v2121
    %2373 = vmatpush1.bf16.msra.mxu0 %v2120
    %2374 = vmatprep.subr.bf16.mxu0 %v2117
    %2375 = vmatpush1.bf16.msra.mxu0 %v2116
    %2376 = vmatprep.subr.bf16.mxu0 %v2113
    %2377 = vmatpush1.bf16.msra.mxu0 %v2112
    %2378 = vmatprep.subr.bf16.mxu0 %v2109
    %2379 = vmatpush1.bf16.msra.mxu0 %v2108
    %2380 = vmatprep.subr.bf16.mxu0 %v2169
    %2381 = vmatpush2.bf16.msra.mxu0 %v2168
    %2382 = vmatprep.subr.bf16.mxu0 %v2165
    %2383 = vmatpush2.bf16.msra.mxu0 %v2164
    %2384 = vmatprep.subr.bf16.mxu0 %v2161
    %2385 = vmatpush2.bf16.msra.mxu0 %v2160
    %2386 = vmatprep.subr.bf16.mxu0 %v2157
    %2387 = vmatpush2.bf16.msra.mxu0 %v2156
    %2388 = vmatprep.subr.bf16.mxu0 %v2153
    %2389 = vmatpush2.bf16.msra.mxu0 %v2152
    %2390 = vmatprep.subr.bf16.mxu0 %v2149
    %2391 = vmatpush2.bf16.msra.mxu0 %v2148
    %2392 = vmatprep.subr.bf16.mxu0 %v2145
    %2393 = vmatpush2.bf16.msra.mxu0 %v2144
    %2394 = vmatprep.subr.bf16.mxu0 %v2141
    %2395 = vmatpush2.bf16.msra.mxu0 %v2140
    %2396 = vmatprep.mubr.bf16.mxu0 %v1571
    %2397 = vmatmul.mubr.bf16.gmra.mxu0 %v1570
    %v2398 = vpop.f32.mrf.mxu0
    %v2399 = vadd.f32 %v1707, %v2398
    %v2400 = vpop.f32.mrf.mxu0
    %v2401 = vadd.f32 %v1711, %v2400
    %v2402 = vpop.f32.mrf.mxu0
    %v2403 = vadd.f32 %v1707, %v2402
    %v2404 = vpop.f32.mrf.mxu0
    %v2405 = vadd.f32 %v1711, %v2404
    %2406 = vdwg.mxu0
    %2407 = vmatprep.subr.bf16.mxu0 %v2201
    %2408 = vmatpush1.bf16.msra.mxu0 %v2200
    %2409 = vmatprep.subr.bf16.mxu0 %v2197
    %2410 = vmatpush1.bf16.msra.mxu0 %v2196
    %2411 = vmatprep.subr.bf16.mxu0 %v2193
    %2412 = vmatpush1.bf16.msra.mxu0 %v2192
    %2413 = vmatprep.subr.bf16.mxu0 %v2189
    %2414 = vmatpush1.bf16.msra.mxu0 %v2188
    %2415 = vmatprep.subr.bf16.mxu0 %v2185
    %2416 = vmatpush1.bf16.msra.mxu0 %v2184
    %2417 = vmatprep.subr.bf16.mxu0 %v2181
    %2418 = vmatpush1.bf16.msra.mxu0 %v2180
    %2419 = vmatprep.subr.bf16.mxu0 %v2177
    %2420 = vmatpush1.bf16.msra.mxu0 %v2176
    %2421 = vmatprep.subr.bf16.mxu0 %v2173
    %2422 = vmatpush1.bf16.msra.mxu0 %v2172
    %2423 = vmatprep.subr.bf16.mxu0 %v2233
    %2424 = vmatpush2.bf16.msra.mxu0 %v2232
    %2425 = vmatprep.subr.bf16.mxu0 %v2229
    %2426 = vmatpush2.bf16.msra.mxu0 %v2228
    %2427 = vmatprep.subr.bf16.mxu0 %v2225
    %2428 = vmatpush2.bf16.msra.mxu0 %v2224
    %2429 = vmatprep.subr.bf16.mxu0 %v2221
    %2430 = vmatpush2.bf16.msra.mxu0 %v2220
    %2431 = vmatprep.subr.bf16.mxu0 %v2217
    %2432 = vmatpush2.bf16.msra.mxu0 %v2216
    %2433 = vmatprep.subr.bf16.mxu0 %v2213
    %2434 = vmatpush2.bf16.msra.mxu0 %v2212
    %2435 = vmatprep.subr.bf16.mxu0 %v2209
    %2436 = vmatpush2.bf16.msra.mxu0 %v2208
    %2437 = vmatprep.subr.bf16.mxu0 %v2205
    %2438 = vmatpush2.bf16.msra.mxu0 %v2204
    %2439 = vmatprep.mubr.bf16.mxu0 %v1573
    %2440 = vmatmul.mubr.bf16.gmra.mxu0 %v1572
    %v2441 = vpop.f32.mrf.mxu0
    %v2442 = vadd.f32 %v2399, %v2441
    %v2443 = vpop.f32.mrf.mxu0
    %v2444 = vadd.f32 %v2401, %v2443
    %v2445 = vpop.f32.mrf.mxu0
    %v2446 = vadd.f32 %v2403, %v2445
    %v2447 = vpop.f32.mrf.mxu0
    %v2448 = vadd.f32 %v2405, %v2447
    %2449 = vdwg.mxu0
    %2450 = vmatprep.subr.bf16.mxu0 %v2139
    %2451 = vmatpush1.bf16.msra.mxu0 %v2138
    %2452 = vmatprep.subr.bf16.mxu0 %v2135
    %2453 = vmatpush1.bf16.msra.mxu0 %v2134
    %2454 = vmatprep.subr.bf16.mxu0 %v2131
    %2455 = vmatpush1.bf16.msra.mxu0 %v2130
    %2456 = vmatprep.subr.bf16.mxu0 %v2127
    %2457 = vmatpush1.bf16.msra.mxu0 %v2126
    %2458 = vmatprep.subr.bf16.mxu0 %v2123
    %2459 = vmatpush1.bf16.msra.mxu0 %v2122
    %2460 = vmatprep.subr.bf16.mxu0 %v2119
    %2461 = vmatpush1.bf16.msra.mxu0 %v2118
    %2462 = vmatprep.subr.bf16.mxu0 %v2115
    %2463 = vmatpush1.bf16.msra.mxu0 %v2114
    %2464 = vmatprep.subr.bf16.mxu0 %v2111
    %2465 = vmatpush1.bf16.msra.mxu0 %v2110
    %2466 = vmatprep.subr.bf16.mxu0 %v2171
    %2467 = vmatpush2.bf16.msra.mxu0 %v2170
    %2468 = vmatprep.subr.bf16.mxu0 %v2167
    %2469 = vmatpush2.bf16.msra.mxu0 %v2166
    %2470 = vmatprep.subr.bf16.mxu0 %v2163
    %2471 = vmatpush2.bf16.msra.mxu0 %v2162
    %2472 = vmatprep.subr.bf16.mxu0 %v2159
    %2473 = vmatpush2.bf16.msra.mxu0 %v2158
    %2474 = vmatprep.subr.bf16.mxu0 %v2155
    %2475 = vmatpush2.bf16.msra.mxu0 %v2154
    %2476 = vmatprep.subr.bf16.mxu0 %v2151
    %2477 = vmatpush2.bf16.msra.mxu0 %v2150
    %2478 = vmatprep.subr.bf16.mxu0 %v2147
    %2479 = vmatpush2.bf16.msra.mxu0 %v2146
    %2480 = vmatprep.subr.bf16.mxu0 %v2143
    %2481 = vmatpush2.bf16.msra.mxu0 %v2142
    %2482 = vmatprep.mubr.bf16.mxu0 %v1571
    %2483 = vmatmul.mubr.bf16.gmra.mxu0 %v1570
    %v2484 = vpop.f32.mrf.mxu0
    %v2485 = vadd.f32 %v1715, %v2484
    %v2486 = vpop.f32.mrf.mxu0
    %v2487 = vadd.f32 %v1719, %v2486
    %v2488 = vpop.f32.mrf.mxu0
    %v2489 = vadd.f32 %v1715, %v2488
    %v2490 = vpop.f32.mrf.mxu0
    %v2491 = vadd.f32 %v1719, %v2490
    %2492 = vdwg.mxu0
    %2493 = vmatprep.subr.bf16.mxu0 %v2203
    %2494 = vmatpush1.bf16.msra.mxu0 %v2202
    %2495 = vmatprep.subr.bf16.mxu0 %v2199
    %2496 = vmatpush1.bf16.msra.mxu0 %v2198
    %2497 = vmatprep.subr.bf16.mxu0 %v2195
    %2498 = vmatpush1.bf16.msra.mxu0 %v2194
    %2499 = vmatprep.subr.bf16.mxu0 %v2191
    %2500 = vmatpush1.bf16.msra.mxu0 %v2190
    %2501 = vmatprep.subr.bf16.mxu0 %v2187
    %2502 = vmatpush1.bf16.msra.mxu0 %v2186
    %2503 = vmatprep.subr.bf16.mxu0 %v2183
    %2504 = vmatpush1.bf16.msra.mxu0 %v2182
    %2505 = vmatprep.subr.bf16.mxu0 %v2179
    %2506 = vmatpush1.bf16.msra.mxu0 %v2178
    %2507 = vmatprep.subr.bf16.mxu0 %v2175
    %2508 = vmatpush1.bf16.msra.mxu0 %v2174
    %2509 = vmatprep.subr.bf16.mxu0 %v2235
    %2510 = vmatpush2.bf16.msra.mxu0 %v2234
    %2511 = vmatprep.subr.bf16.mxu0 %v2231
    %2512 = vmatpush2.bf16.msra.mxu0 %v2230
    %2513 = vmatprep.subr.bf16.mxu0 %v2227
    %2514 = vmatpush2.bf16.msra.mxu0 %v2226
    %2515 = vmatprep.subr.bf16.mxu0 %v2223
    %2516 = vmatpush2.bf16.msra.mxu0 %v2222
    %2517 = vmatprep.subr.bf16.mxu0 %v2219
    %2518 = vmatpush2.bf16.msra.mxu0 %v2218
    %2519 = vmatprep.subr.bf16.mxu0 %v2215
    %2520 = vmatpush2.bf16.msra.mxu0 %v2214
    %2521 = vmatprep.subr.bf16.mxu0 %v2211
    %2522 = vmatpush2.bf16.msra.mxu0 %v2210
    %2523 = vmatprep.subr.bf16.mxu0 %v2207
    %2524 = vmatpush2.bf16.msra.mxu0 %v2206
    %2525 = vmatprep.mubr.bf16.mxu0 %v1573
    %2526 = vmatmul.mubr.bf16.gmra.mxu0 %v1572
    %v2527 = vpop.f32.mrf.mxu0
    %v2528 = vadd.f32 %v2485, %v2527
    %v2529 = vpop.f32.mrf.mxu0
    %v2530 = vadd.f32 %v2487, %v2529
    %v2531 = vpop.f32.mrf.mxu0
    %v2532 = vadd.f32 %v2489, %v2531
    %v2533 = vpop.f32.mrf.mxu0
    %v2534 = vadd.f32 %v2491, %v2533
    %2535 = vdwg.mxu0
    %v2536 = vmax.f32 %v2442, 0.0
    %v2537 = vmax.f32 %v2444, 0.0
    %v2538 = vmax.f32 %v2528, 0.0
    %v2539 = vmax.f32 %v2530, 0.0
    %v2540 = vmax.f32 %v2446, 0.0
    %v2541 = vmax.f32 %v2448, 0.0
    %v2542 = vmax.f32 %v2532, 0.0
    %v2543 = vmax.f32 %v2534, 0.0
    %v2544 = vpack.c.bf16 %v2540, %v2536
    %v2545 = vpack.c.bf16 %v2541, %v2537
    %v2546 = vpack.c.bf16 %v2542, %v2538
    %v2547 = vpack.c.bf16 %v2543, %v2539
    %v2548 = vld [vmem:[#allocation10] sm:$0xf]
    %v2549 = vld [vmem:[#allocation10 + $0x4] sm:$0xf]
    %v2550 = vld [vmem:[#allocation10 + $0x8] sm:$0xf]
    %v2551 = vld [vmem:[#allocation10 + $0xc] sm:$0xf]
    %v2552 = vld [vmem:[#allocation10 + $0x10] sm:$0xf]
    %v2553 = vld [vmem:[#allocation10 + $0x14] sm:$0xf]
    %v2554 = vld [vmem:[#allocation10 + $0x18] sm:$0xf]
    %v2555 = vld [vmem:[#allocation10 + $0x1c] sm:$0xf]
    %v2556 = vld [vmem:[#allocation10 + $0x20] sm:$0xf]
    %v2557 = vld [vmem:[#allocation10 + $0x24] sm:$0xf]
    %v2558 = vld [vmem:[#allocation10 + $0x28] sm:$0xf]
    %v2559 = vld [vmem:[#allocation10 + $0x2c] sm:$0xf]
    %v2560 = vld [vmem:[#allocation10 + $0x30] sm:$0xf]
    %v2561 = vld [vmem:[#allocation10 + $0x34] sm:$0xf]
    %v2562 = vld [vmem:[#allocation10 + $0x38] sm:$0xf]
    %v2563 = vld [vmem:[#allocation10 + $0x3c] sm:$0xf]
    %v2564 = vld [vmem:[#allocation10 + $0x40] sm:$0xf]
    %v2565 = vld [vmem:[#allocation10 + $0x44] sm:$0xf]
    %v2566 = vld [vmem:[#allocation10 + $0x48] sm:$0xf]
    %v2567 = vld [vmem:[#allocation10 + $0x4c] sm:$0xf]
    %v2568 = vld [vmem:[#allocation10 + $0x50] sm:$0xf]
    %v2569 = vld [vmem:[#allocation10 + $0x54] sm:$0xf]
    %v2570 = vld [vmem:[#allocation10 + $0x58] sm:$0xf]
    %v2571 = vld [vmem:[#allocation10 + $0x5c] sm:$0xf]
    %v2572 = vld [vmem:[#allocation10 + $0x60] sm:$0xf]
    %v2573 = vld [vmem:[#allocation10 + $0x64] sm:$0xf]
    %v2574 = vld [vmem:[#allocation10 + $0x68] sm:$0xf]
    %v2575 = vld [vmem:[#allocation10 + $0x6c] sm:$0xf]
    %v2576 = vld [vmem:[#allocation10 + $0x70] sm:$0xf]
    %v2577 = vld [vmem:[#allocation10 + $0x74] sm:$0xf]
    %v2578 = vld [vmem:[#allocation10 + $0x78] sm:$0xf]
    %v2579 = vld [vmem:[#allocation10 + $0x7c] sm:$0xf]
    %v2580 = vld [vmem:[#allocation10 + $0x80] sm:$0xf]
    %v2581 = vld [vmem:[#allocation10 + $0x84] sm:$0xf]
    %v2582 = vld [vmem:[#allocation10 + $0x88] sm:$0xf]
    %v2583 = vld [vmem:[#allocation10 + $0x8c] sm:$0xf]
    %v2584 = vld [vmem:[#allocation10 + $0x90] sm:$0xf]
    %v2585 = vld [vmem:[#allocation10 + $0x94] sm:$0xf]
    %v2586 = vld [vmem:[#allocation10 + $0x98] sm:$0xf]
    %v2587 = vld [vmem:[#allocation10 + $0x9c] sm:$0xf]
    %v2588 = vld [vmem:[#allocation10 + $0xa0] sm:$0xf]
    %v2589 = vld [vmem:[#allocation10 + $0xa4] sm:$0xf]
    %v2590 = vld [vmem:[#allocation10 + $0xa8] sm:$0xf]
    %v2591 = vld [vmem:[#allocation10 + $0xac] sm:$0xf]
    %v2592 = vld [vmem:[#allocation10 + $0xb0] sm:$0xf]
    %v2593 = vld [vmem:[#allocation10 + $0xb4] sm:$0xf]
    %v2594 = vld [vmem:[#allocation10 + $0xb8] sm:$0xf]
    %v2595 = vld [vmem:[#allocation10 + $0xbc] sm:$0xf]
    %v2596 = vld [vmem:[#allocation10 + $0xc0] sm:$0xf]
    %v2597 = vld [vmem:[#allocation10 + $0xc4] sm:$0xf]
    %v2598 = vld [vmem:[#allocation10 + $0xc8] sm:$0xf]
    %v2599 = vld [vmem:[#allocation10 + $0xcc] sm:$0xf]
    %v2600 = vld [vmem:[#allocation10 + $0xd0] sm:$0xf]
    %v2601 = vld [vmem:[#allocation10 + $0xd4] sm:$0xf]
    %v2602 = vld [vmem:[#allocation10 + $0xd8] sm:$0xf]
    %v2603 = vld [vmem:[#allocation10 + $0xdc] sm:$0xf]
    %v2604 = vld [vmem:[#allocation10 + $0xe0] sm:$0xf]
    %v2605 = vld [vmem:[#allocation10 + $0xe4] sm:$0xf]
    %v2606 = vld [vmem:[#allocation10 + $0xe8] sm:$0xf]
    %v2607 = vld [vmem:[#allocation10 + $0xec] sm:$0xf]
    %v2608 = vld [vmem:[#allocation10 + $0xf0] sm:$0xf]
    %v2609 = vld [vmem:[#allocation10 + $0xf4] sm:$0xf]
    %v2610 = vld [vmem:[#allocation10 + $0xf8] sm:$0xf]
    %v2611 = vld [vmem:[#allocation10 + $0xfc] sm:$0xf]
    %v2612 = vld [vmem:[%s6] sm:$0x1]
    %v2614 = vlaneseq
    %v2615 = vshrl.u32 %v2614, 7
    %v2616 = vsub.s32 0, %v2615
    %v2617 = vrot.slane %v2612, %v2616
    %v2683 = vunpack.c.l.b16 %v2548
    %v2684 = vunpack.c.l.b16 %v2549
    %v2685 = vunpack.c.l.b16 %v2550
    %v2686 = vunpack.c.l.b16 %v2551
    %v2687 = vunpack.c.l.b16 %v2552
    %v2688 = vunpack.c.l.b16 %v2553
    %v2689 = vunpack.c.l.b16 %v2554
    %v2690 = vunpack.c.l.b16 %v2555
    %v2691 = vunpack.c.l.b16 %v2556
    %v2692 = vunpack.c.l.b16 %v2557
    %v2693 = vunpack.c.l.b16 %v2558
    %v2694 = vunpack.c.l.b16 %v2559
    %v2695 = vunpack.c.l.b16 %v2560
    %v2696 = vunpack.c.l.b16 %v2561
    %v2697 = vunpack.c.l.b16 %v2562
    %v2698 = vunpack.c.l.b16 %v2563
    %v2699 = vunpack.c.l.b16 %v2564
    %v2700 = vunpack.c.l.b16 %v2565
    %v2701 = vunpack.c.l.b16 %v2566
    %v2702 = vunpack.c.l.b16 %v2567
    %v2703 = vunpack.c.l.b16 %v2568
    %v2704 = vunpack.c.l.b16 %v2569
    %v2705 = vunpack.c.l.b16 %v2570
    %v2706 = vunpack.c.l.b16 %v2571
    %v2707 = vunpack.c.l.b16 %v2572
    %v2708 = vunpack.c.l.b16 %v2573
    %v2709 = vunpack.c.l.b16 %v2574
    %v2710 = vunpack.c.l.b16 %v2575
    %v2711 = vunpack.c.l.b16 %v2576
    %v2712 = vunpack.c.l.b16 %v2577
    %v2713 = vunpack.c.l.b16 %v2578
    %v2714 = vunpack.c.l.b16 %v2579
    %v2715 = vunpack.c.l.b16 %v2580
    %v2716 = vunpack.c.l.b16 %v2581
    %v2717 = vunpack.c.l.b16 %v2582
    %v2718 = vunpack.c.l.b16 %v2583
    %v2719 = vunpack.c.l.b16 %v2584
    %v2720 = vunpack.c.l.b16 %v2585
    %v2721 = vunpack.c.l.b16 %v2586
    %v2722 = vunpack.c.l.b16 %v2587
    %v2723 = vunpack.c.l.b16 %v2588
    %v2724 = vunpack.c.l.b16 %v2589
    %v2725 = vunpack.c.l.b16 %v2590
    %v2726 = vunpack.c.l.b16 %v2591
    %v2727 = vunpack.c.l.b16 %v2592
    %v2728 = vunpack.c.l.b16 %v2593
    %v2729 = vunpack.c.l.b16 %v2594
    %v2730 = vunpack.c.l.b16 %v2595
    %v2731 = vunpack.c.l.b16 %v2596
    %v2732 = vunpack.c.l.b16 %v2597
    %v2733 = vunpack.c.l.b16 %v2598
    %v2734 = vunpack.c.l.b16 %v2599
    %v2735 = vunpack.c.l.b16 %v2600
    %v2736 = vunpack.c.l.b16 %v2601
    %v2737 = vunpack.c.l.b16 %v2602
    %v2738 = vunpack.c.l.b16 %v2603
    %v2739 = vunpack.c.l.b16 %v2604
    %v2740 = vunpack.c.l.b16 %v2605
    %v2741 = vunpack.c.l.b16 %v2606
    %v2742 = vunpack.c.l.b16 %v2607
    %v2743 = vunpack.c.l.b16 %v2608
    %v2744 = vunpack.c.l.b16 %v2609
    %v2745 = vunpack.c.l.b16 %v2610
    %v2746 = vunpack.c.l.b16 %v2611
    %v2747 = vpack.c.b16 %v2684, %v2683
    %v2748 = vpack.c.b16 %v2686, %v2685
    %v2749 = vpack.c.b16 %v2688, %v2687
    %v2750 = vpack.c.b16 %v2690, %v2689
    %v2751 = vpack.c.b16 %v2692, %v2691
    %v2752 = vpack.c.b16 %v2694, %v2693
    %v2753 = vpack.c.b16 %v2696, %v2695
    %v2754 = vpack.c.b16 %v2698, %v2697
    %v2755 = vpack.c.b16 %v2700, %v2699
    %v2756 = vpack.c.b16 %v2702, %v2701
    %v2757 = vpack.c.b16 %v2704, %v2703
    %v2758 = vpack.c.b16 %v2706, %v2705
    %v2759 = vpack.c.b16 %v2708, %v2707
    %v2760 = vpack.c.b16 %v2710, %v2709
    %v2761 = vpack.c.b16 %v2712, %v2711
    %v2762 = vpack.c.b16 %v2714, %v2713
    %v2763 = vpack.c.b16 %v2716, %v2715
    %v2764 = vpack.c.b16 %v2718, %v2717
    %v2765 = vpack.c.b16 %v2720, %v2719
    %v2766 = vpack.c.b16 %v2722, %v2721
    %v2767 = vpack.c.b16 %v2724, %v2723
    %v2768 = vpack.c.b16 %v2726, %v2725
    %v2769 = vpack.c.b16 %v2728, %v2727
    %v2770 = vpack.c.b16 %v2730, %v2729
    %v2771 = vpack.c.b16 %v2732, %v2731
    %v2772 = vpack.c.b16 %v2734, %v2733
    %v2773 = vpack.c.b16 %v2736, %v2735
    %v2774 = vpack.c.b16 %v2738, %v2737
    %v2775 = vpack.c.b16 %v2740, %v2739
    %v2776 = vpack.c.b16 %v2742, %v2741
    %v2777 = vpack.c.b16 %v2744, %v2743
    %v2778 = vpack.c.b16 %v2746, %v2745
    %2811 = vmatprep.subr.bf16.mxu0 0
    %2812 = vmatpush1.bf16.msra.mxu0 %v2754
    %2813 = vmatprep.subr.bf16.mxu0 0
    %2814 = vmatpush1.bf16.msra.mxu0 %v2753
    %2815 = vmatprep.subr.bf16.mxu0 0
    %2816 = vmatpush1.bf16.msra.mxu0 %v2752
    %2817 = vmatprep.subr.bf16.mxu0 0
    %2818 = vmatpush1.bf16.msra.mxu0 %v2751
    %2819 = vmatprep.subr.bf16.mxu0 0
    %2820 = vmatpush1.bf16.msra.mxu0 %v2750
    %2821 = vmatprep.subr.bf16.mxu0 0
    %2822 = vmatpush1.bf16.msra.mxu0 %v2749
    %2823 = vmatprep.subr.bf16.mxu0 0
    %2824 = vmatpush1.bf16.msra.mxu0 %v2748
    %2825 = vmatprep.subr.bf16.mxu0 0
    %2826 = vmatpush1.bf16.msra.mxu0 %v2747
    %2827 = vmatprep.subr.bf16.mxu0 0
    %2828 = vmatpush2.bf16.msra.mxu0 %v2762
    %2829 = vmatprep.subr.bf16.mxu0 0
    %2830 = vmatpush2.bf16.msra.mxu0 %v2761
    %2831 = vmatprep.subr.bf16.mxu0 0
    %2832 = vmatpush2.bf16.msra.mxu0 %v2760
    %2833 = vmatprep.subr.bf16.mxu0 0
    %2834 = vmatpush2.bf16.msra.mxu0 %v2759
    %2835 = vmatprep.subr.bf16.mxu0 0
    %2836 = vmatpush2.bf16.msra.mxu0 %v2758
    %2837 = vmatprep.subr.bf16.mxu0 0
    %2838 = vmatpush2.bf16.msra.mxu0 %v2757
    %2839 = vmatprep.subr.bf16.mxu0 0
    %2840 = vmatpush2.bf16.msra.mxu0 %v2756
    %2841 = vmatprep.subr.bf16.mxu0 0
    %2842 = vmatpush2.bf16.msra.mxu0 %v2755
    %2843 = vmatprep.mubr.bf16.mxu0 %v2545
    %2844 = vmatmul.mubr.bf16.gmra.mxu0 %v2544
    %v2845 = vpop.f32.mrf.mxu0
    %v2846 = vadd.f32 %v2617, %v2845
    %v2847 = vpop.f32.mrf.mxu0
    %v2848 = vpop.f32.mrf.mxu0
    %v2849 = vadd.f32 %v2617, %v2848
    %v2850 = vpop.f32.mrf.mxu0
    %2851 = vdwg.mxu0
    %2852 = vmatprep.subr.bf16.mxu0 0
    %2853 = vmatpush1.bf16.msra.mxu0 %v2770
    %2854 = vmatprep.subr.bf16.mxu0 0
    %2855 = vmatpush1.bf16.msra.mxu0 %v2769
    %2856 = vmatprep.subr.bf16.mxu0 0
    %2857 = vmatpush1.bf16.msra.mxu0 %v2768
    %2858 = vmatprep.subr.bf16.mxu0 0
    %2859 = vmatpush1.bf16.msra.mxu0 %v2767
    %2860 = vmatprep.subr.bf16.mxu0 0
    %2861 = vmatpush1.bf16.msra.mxu0 %v2766
    %2862 = vmatprep.subr.bf16.mxu0 0
    %2863 = vmatpush1.bf16.msra.mxu0 %v2765
    %2864 = vmatprep.subr.bf16.mxu0 0
    %2865 = vmatpush1.bf16.msra.mxu0 %v2764
    %2866 = vmatprep.subr.bf16.mxu0 0
    %2867 = vmatpush1.bf16.msra.mxu0 %v2763
    %2868 = vmatprep.subr.bf16.mxu0 0
    %2869 = vmatpush2.bf16.msra.mxu0 %v2778
    %2870 = vmatprep.subr.bf16.mxu0 0
    %2871 = vmatpush2.bf16.msra.mxu0 %v2777
    %2872 = vmatprep.subr.bf16.mxu0 0
    %2873 = vmatpush2.bf16.msra.mxu0 %v2776
    %2874 = vmatprep.subr.bf16.mxu0 0
    %2875 = vmatpush2.bf16.msra.mxu0 %v2775
    %2876 = vmatprep.subr.bf16.mxu0 0
    %2877 = vmatpush2.bf16.msra.mxu0 %v2774
    %2878 = vmatprep.subr.bf16.mxu0 0
    %2879 = vmatpush2.bf16.msra.mxu0 %v2773
    %2880 = vmatprep.subr.bf16.mxu0 0
    %2881 = vmatpush2.bf16.msra.mxu0 %v2772
    %2882 = vmatprep.subr.bf16.mxu0 0
    %2883 = vmatpush2.bf16.msra.mxu0 %v2771
    %2884 = vmatprep.mubr.bf16.mxu0 %v2547
    %2885 = vmatmul.mubr.bf16.gmra.mxu0 %v2546
    %v2886 = vpop.f32.mrf.mxu0
    %v2887 = vadd.f32 %v2846, %v2886
    %v2888 = vpop.f32.mrf.mxu0
    %v2889 = vpop.f32.mrf.mxu0
    %v2890 = vadd.f32 %v2849, %v2889
    %v2891 = vpop.f32.mrf.mxu0
    %2892 = vdwg.mxu0
    %2893 = vst [vmem:[#allocation11] sm:$0xff] %v2887
    %2894 = vst [vmem:[#allocation11 + $0x8] sm:$0xff] %v2890
    // Predicated region
    $region50: #{tpu_custom_call.1} parent=1 // pred_check
      _
    $region51: #{tpu_custom_call.1} parent=1 // pred_check_branch
      %2896 = sbr.rel (0) target = $region53
    $region52: #{tpu_custom_call.1} parent=1 // pred_region
      %s2898 = ssub.s32 256, 256
      %2899 = vsyncadd [#allocation4], %s2898
      %s2900 = sshll.u32 [#allocation11], 4
      %s2901 = int_to_ptr.vmem [resolvable:$true] %s2900
      %2906 = dma.vmem_to_hbm [thread:$0]  %s2901, 256, %s7, [#allocation4], 128, 128, 8
    $region53: #{tpu_custom_call.1} parent=1 // pred_fallthru
      _
    // Predicated region
    $region54: #{tpu_custom_call.1} parent=1 // pred_check
      _
    $region55: #{tpu_custom_call.1} parent=1 // pred_check_branch
      %2908 = sbr.rel (0) target = $region57
    $region56: #{tpu_custom_call.1} parent=1 // pred_region
      %2909 = dma.done [#allocation4], 256
    $region57: #{tpu_custom_call.1} parent=1 // pred_fallthru
      _
    %2910 = vsyncpa [#allocation3], 1
    %2911 = vsyncpa [#allocation6], 1
    %2912 = vsyncpa [#allocation9], 1
    %2913 = vsyncpa [#allocation4], 1

</llo_original>
